<compile_context>
chip_gen: v7x
topology: tpu7x:2x2x1
jax: 0.10.0
libtpu: 0.0.40
codegen_flags: <defaults>
</compile_context>

<pallas_src>
import jax
import jax.numpy as jnp
from jax.experimental import pallas as pl
from jax.experimental.pallas import tpu as pltpu


def _conv3x3_kernel(xp_ref, w_ref, b_ref, o_ref):
    """One batch image per grid step.

    xp_ref : (1, H+2, W+2, C_in)   reflection-padded NHWC activation tile
    w_ref  : (9*C_in, C_out_p)     im2col-flattened weight, (K, N) orientation,
                                   K ordered (kh, kw, c_in) to match the patch build
    b_ref  : (1, C_out_p)          bias (padded if C_out_p > C_out)
    o_ref  : (1, H*W, C_out_p)     flat-spatial output
    """
    xp = xp_ref[0]                                  # (H+2, W+2, C_in)
    Hp, Wp, C_in = xp.shape
    H, W = Hp - 2, Wp - 2

    # im2col: 9 shifted views concatenated on the channel axis (tap-major,
    # channel-minor), then collapse spatial dims -> (H*W, 9*C_in).
    cols = []
    for kh in range(3):                             # static 3x3 tap loop (unrolled)
        for kw in range(3):
            cols.append(xp[kh:kh + H, kw:kw + W, :])
    patches = jnp.concatenate(cols, axis=-1)        # (H, W, 9*C_in)
    patches = patches.reshape(H * W, 9 * C_in)      # (H*W, 9*C_in)

    # Single MXU matmul + fused bias epilogue.
    out = jnp.dot(patches, w_ref[...], preferred_element_type=jnp.float32)
    o_ref[0] = (out + b_ref[...]).astype(o_ref.dtype)


def conv3x3_forward(x, weight, bias):
    """Conv3x3.forward: ReflectionPad2d(1) followed by Conv2d(C_in, C_out, 3).

    x      : (B, C_in, H, W)  float32   (PyTorch NCHW)
    weight : (C_out, C_in, 3, 3)
    bias   : (C_out,)
    returns (B, C_out, H, W)
    """
    B, C_in, H, W = x.shape
    C_out = weight.shape[0]
    assert weight.shape == (C_out, C_in, 3, 3)
    assert H >= 2 and W >= 2

    # Lane sizing for the output/N dim: only pad up to a 128-multiple when
    # C_out is close to 128; tiny C_out keeps its real lane count (masked
    # store, but 128/C_out fewer HBM bytes).
    if C_out >= 64:
        C_out_p = -(-C_out // 128) * 128
    else:
        C_out_p = C_out

    # NHWC + reflection pad in the wrapper (one cheap XLA op on a tiny array).
    x_nhwc = jnp.transpose(x, (0, 2, 3, 1))                               # (B, H, W, C_in)
    xp = jnp.pad(x_nhwc, ((0, 0), (1, 1), (1, 1), (0, 0)), mode='reflect')  # (B, H+2, W+2, C_in)

    # im2col weight: (C_out, C_in, 3, 3) -> (kh, kw, c_in, c_out) -> (9*C_in, C_out_p).
    # Row index = (kh*3 + kw)*C_in + c_in, matching the kernel's patch concat order.
    w_k = jnp.transpose(weight, (2, 3, 1, 0)).reshape(9 * C_in, C_out)
    w_k = jnp.pad(w_k, ((0, 0), (0, C_out_p - C_out)))
    b_k = jnp.pad(bias, (0, C_out_p - C_out)).reshape(1, C_out_p)

    out_flat = pl.pallas_call(
        _conv3x3_kernel,
        out_shape=jax.ShapeDtypeStruct((B, H * W, C_out_p), x.dtype),
        grid_spec=pl.GridSpec(
            grid=(B,),
            in_specs=[
                pl.BlockSpec((1, H + 2, W + 2, C_in), lambda b: (b, 0, 0, 0)),
                pl.BlockSpec((9 * C_in, C_out_p), lambda b: (0, 0)),
                pl.BlockSpec((1, C_out_p), lambda b: (0, 0)),
            ],
            out_specs=pl.BlockSpec((1, H * W, C_out_p), lambda b: (b, 0, 0)),
        ),
        compiler_params=pltpu.CompilerParams(
            dimension_semantics=("parallel",),   # images independent -> megacore shard
        ),
    )(xp, w_k, b_k)

    out = out_flat[..., :C_out].reshape(B, H, W, C_out)                   # (B, H, W, C_out)
    return jnp.transpose(out, (0, 3, 1, 2))                               # (B, C_out, H, W)


def reference_forward(x, weight, bias):
    xp = jnp.pad(x, ((0, 0), (0, 0), (1, 1), (1, 1)), mode='reflect')
    out = jax.lax.conv_general_dilated(
        xp, weight, window_strides=(1, 1), padding='VALID',
        dimension_numbers=('NCHW', 'OIHW', 'NCHW'),
        precision=jax.lax.Precision.HIGHEST)
    return out + bias.reshape(1, -1, 1, 1)


if __name__ == "__main__":
    B, C_in, C_out, H, W = 2, 4, 4, 16, 16

    key = jax.random.PRNGKey(0)
    kx, kw, kb = jax.random.split(key, 3)
    x = jax.random.normal(kx, (B, C_in, H, W), dtype=jnp.float32)
    weight = jax.random.normal(kw, (C_out, C_in, 3, 3), dtype=jnp.float32) * 0.1
    bias = jax.random.normal(kb, (C_out,), dtype=jnp.float32) * 0.1

    out = conv3x3_forward(x, weight, bias)
    out = jax.block_until_ready(out)

    ref = reference_forward(x, weight, bias)
    assert out.shape == (B, C_out, H, W)
    # all-f32 path: MXU multi-pass f32 vs XLA HIGHEST-precision conv agree tightly
    assert jnp.allclose(out, ref, atol=1e-4, rtol=1e-4)

    print("KERNEL_OK")
</pallas_src>

<mosaic_0001>
module attributes {stable_mosaic.version = 11 : i64} {
  func.func @_conv3x3_kernel(%arg0: i32, %arg1: memref<1x18x18x4xf32, #tpu.memory_space<vmem>>, %arg2: memref<36x4xf32, #tpu.memory_space<vmem>>, %arg3: memref<1x4xf32, #tpu.memory_space<vmem>>, %arg4: memref<1x256x4xf32, #tpu.memory_space<vmem>>) attributes {dimension_semantics = [#tpu.dimension_semantics<parallel>], iteration_bounds = array<i64: 2>, scalar_prefetch = 0 : i64, scratch_operands = 0 : i64, tpu.core_type = #tpu.core_type<tc>, window_params = [{transform_indices = @transform_0, window_bounds = array<i64: 1, 18, 18, 4>}, {pipeline_mode = #tpu.pipeline_mode<synchronous>, transform_indices = @transform_1, window_bounds = array<i64: 36, 4>}, {pipeline_mode = #tpu.pipeline_mode<synchronous>, transform_indices = @transform_2, window_bounds = array<i64: 1, 4>}, {transform_indices = @transform_3, window_bounds = array<i64: 1, 256, 4>}]} {
    %c0 = arith.constant 0 : index
    %c0_0 = arith.constant 0 : index
    %c0_1 = arith.constant 0 : index
    %c0_2 = arith.constant 0 : index
    %0 = vector.load %arg1[%c0, %c0_0, %c0_1, %c0_2] : memref<1x18x18x4xf32, #tpu.memory_space<vmem>>, vector<1x18x18x4xf32>
    %1 = vector.shape_cast %0 : vector<1x18x18x4xf32> to vector<18x18x4xf32>
    %2 = vector.extract_strided_slice %1 {offsets = [0, 0, 0], sizes = [16, 16, 4], strides = [1, 1, 1]} : vector<18x18x4xf32> to vector<16x16x4xf32>
    %3 = vector.extract_strided_slice %1 {offsets = [0, 1, 0], sizes = [16, 16, 4], strides = [1, 1, 1]} : vector<18x18x4xf32> to vector<16x16x4xf32>
    %4 = vector.extract_strided_slice %1 {offsets = [0, 2, 0], sizes = [16, 16, 4], strides = [1, 1, 1]} : vector<18x18x4xf32> to vector<16x16x4xf32>
    %5 = vector.extract_strided_slice %1 {offsets = [1, 0, 0], sizes = [16, 16, 4], strides = [1, 1, 1]} : vector<18x18x4xf32> to vector<16x16x4xf32>
    %6 = vector.extract_strided_slice %1 {offsets = [1, 1, 0], sizes = [16, 16, 4], strides = [1, 1, 1]} : vector<18x18x4xf32> to vector<16x16x4xf32>
    %7 = vector.extract_strided_slice %1 {offsets = [1, 2, 0], sizes = [16, 16, 4], strides = [1, 1, 1]} : vector<18x18x4xf32> to vector<16x16x4xf32>
    %8 = vector.extract_strided_slice %1 {offsets = [2, 0, 0], sizes = [16, 16, 4], strides = [1, 1, 1]} : vector<18x18x4xf32> to vector<16x16x4xf32>
    %9 = vector.extract_strided_slice %1 {offsets = [2, 1, 0], sizes = [16, 16, 4], strides = [1, 1, 1]} : vector<18x18x4xf32> to vector<16x16x4xf32>
    %10 = vector.extract_strided_slice %1 {offsets = [2, 2, 0], sizes = [16, 16, 4], strides = [1, 1, 1]} : vector<18x18x4xf32> to vector<16x16x4xf32>
    %11 = tpu.concatenate %2, %3, %4, %5, %6, %7, %8, %9, %10 in 2 : vector<16x16x4xf32>, vector<16x16x4xf32>, vector<16x16x4xf32>, vector<16x16x4xf32>, vector<16x16x4xf32>, vector<16x16x4xf32>, vector<16x16x4xf32>, vector<16x16x4xf32>, vector<16x16x4xf32> -> vector<16x16x36xf32>
    %12 = vector.shape_cast %11 : vector<16x16x36xf32> to vector<256x36xf32>
    %c0_3 = arith.constant 0 : index
    %c0_4 = arith.constant 0 : index
    %13 = vector.load %arg2[%c0_3, %c0_4] : memref<36x4xf32, #tpu.memory_space<vmem>>, vector<36x4xf32>
    %cst = arith.constant dense<0.000000e+00> : vector<256x4xf32>
    %14 = tpu.matmul %12, %13, %cst {dimension_numbers = #tpu.dot_dimension_numbers<[1], [0], [0], [1], [0, 0, 1, 1], [], []>} : vector<256x36xf32>, vector<36x4xf32>, vector<256x4xf32> -> vector<256x4xf32>
    %c0_5 = arith.constant 0 : index
    %c0_6 = arith.constant 0 : index
    %15 = vector.load %arg3[%c0_5, %c0_6] : memref<1x4xf32, #tpu.memory_space<vmem>>, vector<1x4xf32>
    %16 = vector.broadcast %15 : vector<1x4xf32> to vector<256x4xf32>
    %17 = arith.addf %14, %16 : vector<256x4xf32>
    %c0_7 = arith.constant 0 : index
    %c0_8 = arith.constant 0 : index
    %c0_9 = arith.constant 0 : index
    %18 = vector.load %arg4[%c0_7, %c0_8, %c0_9] : memref<1x256x4xf32, #tpu.memory_space<vmem>>, vector<1x256x4xf32>
    %19 = vector.shape_cast %18 : vector<1x256x4xf32> to vector<256x4xf32>
    %20 = vector.shape_cast %17 : vector<256x4xf32> to vector<1x256x4xf32>
    tpu.vector_store %arg4[%c0_7, %c0_8, %c0_9], %20 {strides = array<i32>} : memref<1x256x4xf32, #tpu.memory_space<vmem>>, vector<1x256x4xf32>,
    return
  }
  func.func @transform_0(%arg0: i32) -> (i32, i32, i32, i32) {
    %c0_i32 = arith.constant 0 : i32
    %c0_i32_0 = arith.constant 0 : i32
    %c0_i32_1 = arith.constant 0 : i32
    %c0_i32_2 = arith.constant 0 : i32
    return %arg0, %c0_i32, %c0_i32_0, %c0_i32_1 : i32, i32, i32, i32
  }
  func.func @transform_1(%arg0: i32) -> (i32, i32) {
    %c0_i32 = arith.constant 0 : i32
    %c0_i32_0 = arith.constant 0 : i32
    %c0_i32_1 = arith.constant 0 : i32
    return %c0_i32, %c0_i32_0 : i32, i32
  }
  func.func @transform_2(%arg0: i32) -> (i32, i32) {
    %c0_i32 = arith.constant 0 : i32
    %c0_i32_0 = arith.constant 0 : i32
    %c0_i32_1 = arith.constant 0 : i32
    return %c0_i32, %c0_i32_0 : i32, i32
  }
  func.func @transform_3(%arg0: i32) -> (i32, i32, i32) {
    %c0_i32 = arith.constant 0 : i32
    %c0_i32_0 = arith.constant 0 : i32
    %c0_i32_1 = arith.constant 0 : i32
    return %arg0, %c0_i32, %c0_i32_0 : i32, i32, i32
  }
}

</mosaic_0001>

<llo_original>
// kernel: tpu_custom_call.1
$region0: #{tpu_custom_call.1}
  #allocation0 [shape = 'u32[]', space=smem, size = 0x4, offset = 0x4, fixed_abs, tag = 'smem constant byte address 0x4 - core index']
  #allocation1 [shape = 'u32[144,128]{1,0:T(1,128)}', space=vmem, size = 0x12000, scoped, tag = 'internal scratch']
  %s0 = inlined_call_operand.vmem [shape: f32[2,18,18,4], index: 0, kind: input, shape index: {}]
  %s1 = inlined_call_operand.vmem [shape: f32[36,4], index: 1, kind: input, shape index: {}]
  %s2 = inlined_call_operand.vmem [shape: f32[1,4], index: 2, kind: input, shape index: {}]
  %s3 = inlined_call_operand.vmem [shape: f32[2,256,4], index: 3, kind: output, shape index: {}]
  %s4 = sld [smem:[#allocation0]]
  $region45: #{tpu_custom_call.1} parent=0
    _
  %s6 = ssub.s32 1, %s4
  %s7 = scalar_select 0, %s6, %s4
  loop: start=0, step=1, limit=4
  $region2: #{tpu_custom_call.1} parent=0 // loop_pre_header
    _
  $region3: #{tpu_custom_call.1} parent=0 // loop_header
    %s9 = sphi 0, %s13
    %p10 = scmp.ge.s32.totalorder %s9, 4
    %s19 = sphi 0, %s21
    %s22 = sphi 0, %s19
    %s23 = sphi 0, %s22
    %s39 = sphi 0, %s23
    %s43 = sphi 0, %s43
    %s45 = sphi 0, %s43
    %s46 = sphi 0, %s45
    %s60 = sphi 0, %s46
    %s64 = sphi 0, %s64
    %s66 = sphi 0, %s64
    %s67 = sphi 0, %s66
    %s81 = sphi 0, %s67
    %s87 = sphi 0, %s89
    %s90 = sphi 0, %s87
    %s91 = sphi 0, %s90
    %s107 = sphi 0, %s91
  $region4: #{tpu_custom_call.1} parent=0 // loop_header_branch
    %12 = sbr.rel (%p10) target = $region8
  $region5: #{tpu_custom_call.1} parent=0 // loop_body
    %s14 = ssub.s32 %s9, 1
    %s15 = ssub.s32 %s9, 2
    %s16 = sadd.s32 %s9, 1
    %s17 = ssub.s32 %s9, %s16
    %p18 = scmp.eq.s32.totalorder %s17, 0
    %s20 = sadd.s32 %s19, 1
    %s21 = scalar_select %p18, %s19, %s20
    %p24 = pneg %p18
    %p25 = scmp.eq.s32.totalorder %s9, 1
    %p26 = por %p24, %p25
    %p27 = scmp.ne.s32.totalorder %s19, %s22
    %p28 = scmp.eq.s32.totalorder %s9, 0
    %p29 = por %p27, %p28
    %p30 = scmp.ne.s32.totalorder %s19, %s22
    %p31 = scmp.eq.s32.totalorder %s14, 1
    %p32 = por %p30, %p31
    %p33 = scmp.ne.s32.totalorder %s22, %s23
    %p34 = scmp.eq.s32.totalorder %s14, 0
    %p35 = por %p33, %p34
    %p36 = scmp.ne.s32.totalorder %s22, %s23
    %p37 = scmp.eq.s32.totalorder %s15, 1
    %p38 = por %p36, %p37
    %p40 = scmp.ne.s32.totalorder %s23, %s39
    %p41 = scmp.eq.s32.totalorder %s15, 0
    %p42 = por %p40, %p41
    %s44 = sadd.s32 %s43, 1
    %p47 = scmp.eq.s32.totalorder %s9, 1
    %p48 = scmp.ne.s32.totalorder %s43, %s45
    %p49 = scmp.eq.s32.totalorder %s9, 0
    %p50 = por %p48, %p49
    %p51 = scmp.ne.s32.totalorder %s43, %s45
    %p52 = scmp.eq.s32.totalorder %s14, 1
    %p53 = por %p51, %p52
    %p54 = scmp.ne.s32.totalorder %s45, %s46
    %p55 = scmp.eq.s32.totalorder %s14, 0
    %p56 = por %p54, %p55
    %p57 = scmp.ne.s32.totalorder %s45, %s46
    %p58 = scmp.eq.s32.totalorder %s15, 1
    %p59 = por %p57, %p58
    %p61 = scmp.ne.s32.totalorder %s46, %s60
    %p62 = scmp.eq.s32.totalorder %s15, 0
    %p63 = por %p61, %p62
    %s65 = sadd.s32 %s64, 1
    %p68 = scmp.eq.s32.totalorder %s9, 1
    %p69 = scmp.ne.s32.totalorder %s64, %s66
    %p70 = scmp.eq.s32.totalorder %s9, 0
    %p71 = por %p69, %p70
    %p72 = scmp.ne.s32.totalorder %s64, %s66
    %p73 = scmp.eq.s32.totalorder %s14, 1
    %p74 = por %p72, %p73
    %p75 = scmp.ne.s32.totalorder %s66, %s67
    %p76 = scmp.eq.s32.totalorder %s14, 0
    %p77 = por %p75, %p76
    %p78 = scmp.ne.s32.totalorder %s66, %s67
    %p79 = scmp.eq.s32.totalorder %s15, 1
    %p80 = por %p78, %p79
    %p82 = scmp.ne.s32.totalorder %s67, %s81
    %p83 = scmp.eq.s32.totalorder %s15, 0
    %p84 = por %p82, %p83
    %s85 = ssub.s32 %s9, %s16
    %p86 = scmp.eq.s32.totalorder %s85, 0
    %s88 = sadd.s32 %s87, 1
    %s89 = scalar_select %p86, %s87, %s88
    %p92 = pneg %p86
    %p93 = scmp.eq.s32.totalorder %s9, 1
    %p94 = por %p92, %p93
    %p95 = scmp.ne.s32.totalorder %s87, %s90
    %p96 = scmp.eq.s32.totalorder %s9, 0
    %p97 = por %p95, %p96
    %p98 = scmp.ne.s32.totalorder %s87, %s90
    %p99 = scmp.eq.s32.totalorder %s14, 1
    %p100 = por %p98, %p99
    %p101 = scmp.ne.s32.totalorder %s90, %s91
    %p102 = scmp.eq.s32.totalorder %s14, 0
    %p103 = por %p101, %p102
    %p104 = scmp.ne.s32.totalorder %s90, %s91
    %p105 = scmp.eq.s32.totalorder %s15, 1
    %p106 = por %p104, %p105
    %p108 = scmp.ne.s32.totalorder %s91, %s107
    %p109 = scmp.eq.s32.totalorder %s15, 0
    %p110 = por %p108, %p109
    %p111 = scmp.le.s32.totalorder 1, %s9
    %p112 = scmp.lt.s32.totalorder %s9, 3
    %p113 = pnand %p111, %p112
    %p114 = pneg %p113
    // Predicated region
    $region9: #{tpu_custom_call.1} parent=5 // pred_check
      _
    $region10: #{tpu_custom_call.1} parent=5 // pred_check_branch
      %116 = sbr.rel (%p113) target = $region12
    $region11: #{tpu_custom_call.1} parent=5 // pred_region
      %s117 = ssub.s32 %s9, 1
      // Predicated region
      $region13: #{tpu_custom_call.1} parent=11 // pred_check
        %p118 = pneg %p56
      $region14: #{tpu_custom_call.1} parent=11 // pred_check_branch
        %120 = sbr.rel (%p118) target = $region16
      $region15: #{tpu_custom_call.1} parent=11 // pred_region
        _
      $region16: #{tpu_custom_call.1} parent=11 // pred_fallthru
        _
      // Predicated region
      $region17: #{tpu_custom_call.1} parent=11 // pred_check
        %p121 = pneg %p77
      $region18: #{tpu_custom_call.1} parent=11 // pred_check_branch
        %123 = sbr.rel (%p121) target = $region20
      $region19: #{tpu_custom_call.1} parent=11 // pred_region
        _
      $region20: #{tpu_custom_call.1} parent=11 // pred_fallthru
        _
    $region12: #{tpu_custom_call.1} parent=5 // pred_fallthru
      _
    %p124 = scmp.lt.s32.totalorder %s9, 2
    // Predicated region
    $region21: #{tpu_custom_call.1} parent=5 // pred_check
      %p125 = pneg %p124
    $region22: #{tpu_custom_call.1} parent=5 // pred_check_branch
      %127 = sbr.rel (%p125) target = $region24
    $region23: #{tpu_custom_call.1} parent=5 // pred_region
      // Predicated region
      $region25: #{tpu_custom_call.1} parent=23 // pred_check
        %p128 = pneg %p29
      $region26: #{tpu_custom_call.1} parent=23 // pred_check_branch
        %130 = sbr.rel (%p128) target = $region28
      $region27: #{tpu_custom_call.1} parent=23 // pred_region
        %p131 = scmp.lt.s32.totalorder %s9, 1
        %s132 = scalar_select %p131, %s9, 1
        %s133 = smul.addr %s132, 54
        %s134 = smul.addr %s133, 8
        %s135 = scalar_lea.vmem %s0, %s134
      $region28: #{tpu_custom_call.1} parent=23 // pred_fallthru
        _
    $region24: #{tpu_custom_call.1} parent=5 // pred_fallthru
      _
    %p136 = scmp.le.s32.totalorder 1, %s9
    %p137 = scmp.lt.s32.totalorder %s9, 3
    %p138 = pnand %p136, %p137
    %p139 = pneg %p138
    // Predicated region
    $region29: #{tpu_custom_call.1} parent=5 // pred_check
      _
    $region30: #{tpu_custom_call.1} parent=5 // pred_check_branch
      %141 = sbr.rel (%p138) target = $region32
    $region31: #{tpu_custom_call.1} parent=5 // pred_region
      %s142 = ssub.s32 %s9, 1
      %p143 = scmp.lt.s32.totalorder %s14, 1
      %s144 = scalar_select %p143, %s14, 1
      %s145 = smul.addr %s144, 54
      %s146 = smul.addr %s145, 8
      %s147 = scalar_lea.vmem %s0, %s146
      %p148 = pneg %p35
      %p149 = pneg %p32
      %p150 = pneg %p56
      %p151 = pneg %p53
      %p152 = pneg %p77
      %p153 = pneg %p74
      %p154 = pneg %p103
      %p155 = pneg %p100
      %p156 = scmp.lt.s32.totalorder %s14, 1
      %s157 = scalar_select %p156, %s14, 1
      %s158 = smul.addr %s157, 32
      %s159 = smul.addr %s158, 8
      %s160 = scalar_lea.vmem %s3, %s159
      %p161 = scmp.lt.s32.totalorder %s14, 1
      %s162 = scalar_select %p161, %s14, 1
      %s163 = smul.addr %s162, 54
      %s164 = smul.addr %s163, 8
      %s165 = scalar_lea.vmem %s0, %s164
      %p166 = scmp.lt.s32.totalorder %s14, 1
      %s167 = scalar_select %p166, %s14, 1
      %s168 = smul.addr %s167, 32
      %s169 = smul.addr %s168, 8
      %s170 = scalar_lea.vmem %s3, %s169
      %v171 = vld [vmem:[%s165] sm:$0xff]
      %v172 = vld [vmem:[%s165 + $0x8] sm:$0xff]
      %v173 = vld [vmem:[%s165 + $0x10] sm:$0x3]
      %v174 = vld [vmem:[%s165 + $0x18] sm:$0xff]
      %v175 = vld [vmem:[%s165 + $0x20] sm:$0xff]
      %v176 = vld [vmem:[%s165 + $0x28] sm:$0x3]
      %v177 = vld [vmem:[%s165 + $0x30] sm:$0xff]
      %v178 = vld [vmem:[%s165 + $0x38] sm:$0xff]
      %v179 = vld [vmem:[%s165 + $0x40] sm:$0x3]
      %v180 = vld [vmem:[%s165 + $0x48] sm:$0xff]
      %v181 = vld [vmem:[%s165 + $0x50] sm:$0xff]
      %v182 = vld [vmem:[%s165 + $0x58] sm:$0x3]
      %v183 = vld [vmem:[%s165 + $0x60] sm:$0xff]
      %v184 = vld [vmem:[%s165 + $0x68] sm:$0xff]
      %v185 = vld [vmem:[%s165 + $0x70] sm:$0x3]
      %v186 = vld [vmem:[%s165 + $0x78] sm:$0xff]
      %v187 = vld [vmem:[%s165 + $0x80] sm:$0xff]
      %v188 = vld [vmem:[%s165 + $0x88] sm:$0x3]
      %v189 = vld [vmem:[%s165 + $0x90] sm:$0xff]
      %v190 = vld [vmem:[%s165 + $0x98] sm:$0xff]
      %v191 = vld [vmem:[%s165 + $0xa0] sm:$0x3]
      %v192 = vld [vmem:[%s165 + $0xa8] sm:$0xff]
      %v193 = vld [vmem:[%s165 + $0xb0] sm:$0xff]
      %v194 = vld [vmem:[%s165 + $0xb8] sm:$0x3]
      %v195 = vld [vmem:[%s165 + $0xc0] sm:$0xff]
      %v196 = vld [vmem:[%s165 + $0xc8] sm:$0xff]
      %v197 = vld [vmem:[%s165 + $0xd0] sm:$0x3]
      %v198 = vld [vmem:[%s165 + $0xd8] sm:$0xff]
      %v199 = vld [vmem:[%s165 + $0xe0] sm:$0xff]
      %v200 = vld [vmem:[%s165 + $0xe8] sm:$0x3]
      %v201 = vld [vmem:[%s165 + $0xf0] sm:$0xff]
      %v202 = vld [vmem:[%s165 + $0xf8] sm:$0xff]
      %v203 = vld [vmem:[%s165 + $0x100] sm:$0x3]
      %v204 = vld [vmem:[%s165 + $0x108] sm:$0xff]
      %v205 = vld [vmem:[%s165 + $0x110] sm:$0xff]
      %v206 = vld [vmem:[%s165 + $0x118] sm:$0x3]
      %v207 = vld [vmem:[%s165 + $0x120] sm:$0xff]
      %v208 = vld [vmem:[%s165 + $0x128] sm:$0xff]
      %v209 = vld [vmem:[%s165 + $0x130] sm:$0x3]
      %v210 = vld [vmem:[%s165 + $0x138] sm:$0xff]
      %v211 = vld [vmem:[%s165 + $0x140] sm:$0xff]
      %v212 = vld [vmem:[%s165 + $0x148] sm:$0x3]
      %v213 = vld [vmem:[%s165 + $0x150] sm:$0xff]
      %v214 = vld [vmem:[%s165 + $0x158] sm:$0xff]
      %v215 = vld [vmem:[%s165 + $0x160] sm:$0x3]
      %v216 = vld [vmem:[%s165 + $0x168] sm:$0xff]
      %v217 = vld [vmem:[%s165 + $0x170] sm:$0xff]
      %v218 = vld [vmem:[%s165 + $0x178] sm:$0x3]
      %v219 = vld [vmem:[%s165 + $0x180] sm:$0xff]
      %v220 = vld [vmem:[%s165 + $0x188] sm:$0xff]
      %v221 = vld [vmem:[%s165 + $0x190] sm:$0x3]
      %v222 = vld [vmem:[%s165 + $0x198] sm:$0xff]
      %v223 = vld [vmem:[%s165 + $0x1a0] sm:$0xff]
      %v224 = vld [vmem:[%s165 + $0x1a8] sm:$0x3]
      %vm273 = vcmask 1046528
      %v274 = vrot.slane %v171, 1
      %v275 = vrot.slane %v172, 1
      %v276 = vsel %vm273, %v274, %v275
      %v277 = vrot.slane %v173, 1
      %v278 = vsel %vm273, %v275, %v277
      %v279 = vrot.slane %v174, 1
      %v280 = vrot.slane %v175, 1
      %v281 = vsel %vm273, %v279, %v280
      %v282 = vrot.slane %v176, 1
      %v283 = vsel %vm273, %v280, %v282
      %v284 = vrot.slane %v177, 1
      %v285 = vrot.slane %v178, 1
      %v286 = vsel %vm273, %v284, %v285
      %v287 = vrot.slane %v179, 1
      %v288 = vsel %vm273, %v285, %v287
      %v289 = vrot.slane %v180, 1
      %v290 = vrot.slane %v181, 1
      %v291 = vsel %vm273, %v289, %v290
      %v292 = vrot.slane %v182, 1
      %v293 = vsel %vm273, %v290, %v292
      %v294 = vrot.slane %v183, 1
      %v295 = vrot.slane %v184, 1
      %v296 = vsel %vm273, %v294, %v295
      %v297 = vrot.slane %v185, 1
      %v298 = vsel %vm273, %v295, %v297
      %v299 = vrot.slane %v186, 1
      %v300 = vrot.slane %v187, 1
      %v301 = vsel %vm273, %v299, %v300
      %v302 = vrot.slane %v188, 1
      %v303 = vsel %vm273, %v300, %v302
      %v304 = vrot.slane %v189, 1
      %v305 = vrot.slane %v190, 1
      %v306 = vsel %vm273, %v304, %v305
      %v307 = vrot.slane %v191, 1
      %v308 = vsel %vm273, %v305, %v307
      %v309 = vrot.slane %v192, 1
      %v310 = vrot.slane %v193, 1
      %v311 = vsel %vm273, %v309, %v310
      %v312 = vrot.slane %v194, 1
      %v313 = vsel %vm273, %v310, %v312
      %v314 = vrot.slane %v195, 1
      %v315 = vrot.slane %v196, 1
      %v316 = vsel %vm273, %v314, %v315
      %v317 = vrot.slane %v197, 1
      %v318 = vsel %vm273, %v315, %v317
      %v319 = vrot.slane %v198, 1
      %v320 = vrot.slane %v199, 1
      %v321 = vsel %vm273, %v319, %v320
      %v322 = vrot.slane %v200, 1
      %v323 = vsel %vm273, %v320, %v322
      %v324 = vrot.slane %v201, 1
      %v325 = vrot.slane %v202, 1
      %v326 = vsel %vm273, %v324, %v325
      %v327 = vrot.slane %v203, 1
      %v328 = vsel %vm273, %v325, %v327
      %v329 = vrot.slane %v204, 1
      %v330 = vrot.slane %v205, 1
      %v331 = vsel %vm273, %v329, %v330
      %v332 = vrot.slane %v206, 1
      %v333 = vsel %vm273, %v330, %v332
      %v334 = vrot.slane %v207, 1
      %v335 = vrot.slane %v208, 1
      %v336 = vsel %vm273, %v334, %v335
      %v337 = vrot.slane %v209, 1
      %v338 = vsel %vm273, %v335, %v337
      %v339 = vrot.slane %v210, 1
      %v340 = vrot.slane %v211, 1
      %v341 = vsel %vm273, %v339, %v340
      %v342 = vrot.slane %v212, 1
      %v343 = vsel %vm273, %v340, %v342
      %v344 = vrot.slane %v213, 1
      %v345 = vrot.slane %v214, 1
      %v346 = vsel %vm273, %v344, %v345
      %v347 = vrot.slane %v215, 1
      %v348 = vsel %vm273, %v345, %v347
      %v349 = vrot.slane %v216, 1
      %v350 = vrot.slane %v217, 1
      %v351 = vsel %vm273, %v349, %v350
      %v352 = vrot.slane %v218, 1
      %v353 = vsel %vm273, %v350, %v352
      %354 = vrot.lane.b32.xlu0 %v276, 4
      %v355 = vpop.permute.xlu0 %354
      %356 = vrot.lane.b32.xlu0 %v278, 4
      %v357 = vpop.permute.xlu0 %356
      %358 = vrot.lane.b32.xlu0 %v281, 4
      %v359 = vpop.permute.xlu0 %358
      %360 = vrot.lane.b32.xlu0 %v283, 4
      %v361 = vpop.permute.xlu0 %360
      %362 = vrot.lane.b32.xlu0 %v286, 4
      %v363 = vpop.permute.xlu0 %362
      %364 = vrot.lane.b32.xlu0 %v288, 4
      %v365 = vpop.permute.xlu0 %364
      %366 = vrot.lane.b32.xlu0 %v291, 4
      %v367 = vpop.permute.xlu0 %366
      %368 = vrot.lane.b32.xlu0 %v293, 4
      %v369 = vpop.permute.xlu0 %368
      %370 = vrot.lane.b32.xlu0 %v296, 4
      %v371 = vpop.permute.xlu0 %370
      %372 = vrot.lane.b32.xlu0 %v298, 4
      %v373 = vpop.permute.xlu0 %372
      %374 = vrot.lane.b32.xlu0 %v301, 4
      %v375 = vpop.permute.xlu0 %374
      %376 = vrot.lane.b32.xlu0 %v303, 4
      %v377 = vpop.permute.xlu0 %376
      %378 = vrot.lane.b32.xlu0 %v306, 4
      %v379 = vpop.permute.xlu0 %378
      %380 = vrot.lane.b32.xlu0 %v308, 4
      %v381 = vpop.permute.xlu0 %380
      %382 = vrot.lane.b32.xlu0 %v311, 4
      %v383 = vpop.permute.xlu0 %382
      %384 = vrot.lane.b32.xlu0 %v313, 4
      %v385 = vpop.permute.xlu0 %384
      %386 = vrot.lane.b32.xlu0 %v316, 4
      %v387 = vpop.permute.xlu0 %386
      %388 = vrot.lane.b32.xlu0 %v318, 4
      %v389 = vpop.permute.xlu0 %388
      %390 = vrot.lane.b32.xlu0 %v321, 4
      %v391 = vpop.permute.xlu0 %390
      %392 = vrot.lane.b32.xlu0 %v323, 4
      %v393 = vpop.permute.xlu0 %392
      %394 = vrot.lane.b32.xlu0 %v326, 4
      %v395 = vpop.permute.xlu0 %394
      %396 = vrot.lane.b32.xlu0 %v328, 4
      %v397 = vpop.permute.xlu0 %396
      %398 = vrot.lane.b32.xlu0 %v331, 4
      %v399 = vpop.permute.xlu0 %398
      %400 = vrot.lane.b32.xlu0 %v333, 4
      %v401 = vpop.permute.xlu0 %400
      %402 = vrot.lane.b32.xlu0 %v336, 4
      %v403 = vpop.permute.xlu0 %402
      %404 = vrot.lane.b32.xlu0 %v338, 4
      %v405 = vpop.permute.xlu0 %404
      %406 = vrot.lane.b32.xlu0 %v341, 4
      %v407 = vpop.permute.xlu0 %406
      %408 = vrot.lane.b32.xlu0 %v343, 4
      %v409 = vpop.permute.xlu0 %408
      %410 = vrot.lane.b32.xlu0 %v346, 4
      %v411 = vpop.permute.xlu0 %410
      %412 = vrot.lane.b32.xlu0 %v348, 4
      %v413 = vpop.permute.xlu0 %412
      %414 = vrot.lane.b32.xlu0 %v351, 4
      %v415 = vpop.permute.xlu0 %414
      %416 = vrot.lane.b32.xlu0 %v353, 4
      %v417 = vpop.permute.xlu0 %416
      %vm450 = vcmask 1045504
      %v451 = vrot.slane %v171, 2
      %v452 = vrot.slane %v172, 2
      %v453 = vsel %vm450, %v451, %v452
      %v454 = vrot.slane %v173, 2
      %v455 = vsel %vm450, %v452, %v454
      %v456 = vrot.slane %v174, 2
      %v457 = vrot.slane %v175, 2
      %v458 = vsel %vm450, %v456, %v457
      %v459 = vrot.slane %v176, 2
      %v460 = vsel %vm450, %v457, %v459
      %v461 = vrot.slane %v177, 2
      %v462 = vrot.slane %v178, 2
      %v463 = vsel %vm450, %v461, %v462
      %v464 = vrot.slane %v179, 2
      %v465 = vsel %vm450, %v462, %v464
      %v466 = vrot.slane %v180, 2
      %v467 = vrot.slane %v181, 2
      %v468 = vsel %vm450, %v466, %v467
      %v469 = vrot.slane %v182, 2
      %v470 = vsel %vm450, %v467, %v469
      %v471 = vrot.slane %v183, 2
      %v472 = vrot.slane %v184, 2
      %v473 = vsel %vm450, %v471, %v472
      %v474 = vrot.slane %v185, 2
      %v475 = vsel %vm450, %v472, %v474
      %v476 = vrot.slane %v186, 2
      %v477 = vrot.slane %v187, 2
      %v478 = vsel %vm450, %v476, %v477
      %v479 = vrot.slane %v188, 2
      %v480 = vsel %vm450, %v477, %v479
      %v481 = vrot.slane %v189, 2
      %v482 = vrot.slane %v190, 2
      %v483 = vsel %vm450, %v481, %v482
      %v484 = vrot.slane %v191, 2
      %v485 = vsel %vm450, %v482, %v484
      %v486 = vrot.slane %v192, 2
      %v487 = vrot.slane %v193, 2
      %v488 = vsel %vm450, %v486, %v487
      %v489 = vrot.slane %v194, 2
      %v490 = vsel %vm450, %v487, %v489
      %v491 = vrot.slane %v195, 2
      %v492 = vrot.slane %v196, 2
      %v493 = vsel %vm450, %v491, %v492
      %v494 = vrot.slane %v197, 2
      %v495 = vsel %vm450, %v492, %v494
      %v496 = vrot.slane %v198, 2
      %v497 = vrot.slane %v199, 2
      %v498 = vsel %vm450, %v496, %v497
      %v499 = vrot.slane %v200, 2
      %v500 = vsel %vm450, %v497, %v499
      %v501 = vrot.slane %v201, 2
      %v502 = vrot.slane %v202, 2
      %v503 = vsel %vm450, %v501, %v502
      %v504 = vrot.slane %v203, 2
      %v505 = vsel %vm450, %v502, %v504
      %v506 = vrot.slane %v204, 2
      %v507 = vrot.slane %v205, 2
      %v508 = vsel %vm450, %v506, %v507
      %v509 = vrot.slane %v206, 2
      %v510 = vsel %vm450, %v507, %v509
      %v511 = vrot.slane %v207, 2
      %v512 = vrot.slane %v208, 2
      %v513 = vsel %vm450, %v511, %v512
      %v514 = vrot.slane %v209, 2
      %v515 = vsel %vm450, %v512, %v514
      %v516 = vrot.slane %v210, 2
      %v517 = vrot.slane %v211, 2
      %v518 = vsel %vm450, %v516, %v517
      %v519 = vrot.slane %v212, 2
      %v520 = vsel %vm450, %v517, %v519
      %v521 = vrot.slane %v213, 2
      %v522 = vrot.slane %v214, 2
      %v523 = vsel %vm450, %v521, %v522
      %v524 = vrot.slane %v215, 2
      %v525 = vsel %vm450, %v522, %v524
      %v526 = vrot.slane %v216, 2
      %v527 = vrot.slane %v217, 2
      %v528 = vsel %vm450, %v526, %v527
      %v529 = vrot.slane %v218, 2
      %v530 = vsel %vm450, %v527, %v529
      %531 = vrot.lane.b32.xlu0 %v453, 8
      %v532 = vpop.permute.xlu0 %531
      %533 = vrot.lane.b32.xlu0 %v455, 8
      %v534 = vpop.permute.xlu0 %533
      %535 = vrot.lane.b32.xlu0 %v458, 8
      %v536 = vpop.permute.xlu0 %535
      %537 = vrot.lane.b32.xlu0 %v460, 8
      %v538 = vpop.permute.xlu0 %537
      %539 = vrot.lane.b32.xlu0 %v463, 8
      %v540 = vpop.permute.xlu0 %539
      %541 = vrot.lane.b32.xlu0 %v465, 8
      %v542 = vpop.permute.xlu0 %541
      %543 = vrot.lane.b32.xlu0 %v468, 8
      %v544 = vpop.permute.xlu0 %543
      %545 = vrot.lane.b32.xlu0 %v470, 8
      %v546 = vpop.permute.xlu0 %545
      %547 = vrot.lane.b32.xlu0 %v473, 8
      %v548 = vpop.permute.xlu0 %547
      %549 = vrot.lane.b32.xlu0 %v475, 8
      %v550 = vpop.permute.xlu0 %549
      %551 = vrot.lane.b32.xlu0 %v478, 8
      %v552 = vpop.permute.xlu0 %551
      %553 = vrot.lane.b32.xlu0 %v480, 8
      %v554 = vpop.permute.xlu0 %553
      %555 = vrot.lane.b32.xlu0 %v483, 8
      %v556 = vpop.permute.xlu0 %555
      %557 = vrot.lane.b32.xlu0 %v485, 8
      %v558 = vpop.permute.xlu0 %557
      %559 = vrot.lane.b32.xlu0 %v488, 8
      %v560 = vpop.permute.xlu0 %559
      %561 = vrot.lane.b32.xlu0 %v490, 8
      %v562 = vpop.permute.xlu0 %561
      %563 = vrot.lane.b32.xlu0 %v493, 8
      %v564 = vpop.permute.xlu0 %563
      %565 = vrot.lane.b32.xlu0 %v495, 8
      %v566 = vpop.permute.xlu0 %565
      %567 = vrot.lane.b32.xlu0 %v498, 8
      %v568 = vpop.permute.xlu0 %567
      %569 = vrot.lane.b32.xlu0 %v500, 8
      %v570 = vpop.permute.xlu0 %569
      %571 = vrot.lane.b32.xlu0 %v503, 8
      %v572 = vpop.permute.xlu0 %571
      %573 = vrot.lane.b32.xlu0 %v505, 8
      %v574 = vpop.permute.xlu0 %573
      %575 = vrot.lane.b32.xlu0 %v508, 8
      %v576 = vpop.permute.xlu0 %575
      %577 = vrot.lane.b32.xlu0 %v510, 8
      %v578 = vpop.permute.xlu0 %577
      %579 = vrot.lane.b32.xlu0 %v513, 8
      %v580 = vpop.permute.xlu0 %579
      %581 = vrot.lane.b32.xlu0 %v515, 8
      %v582 = vpop.permute.xlu0 %581
      %583 = vrot.lane.b32.xlu0 %v518, 8
      %v584 = vpop.permute.xlu0 %583
      %585 = vrot.lane.b32.xlu0 %v520, 8
      %v586 = vpop.permute.xlu0 %585
      %587 = vrot.lane.b32.xlu0 %v523, 8
      %v588 = vpop.permute.xlu0 %587
      %589 = vrot.lane.b32.xlu0 %v525, 8
      %v590 = vpop.permute.xlu0 %589
      %591 = vrot.lane.b32.xlu0 %v528, 8
      %v592 = vpop.permute.xlu0 %591
      %593 = vrot.lane.b32.xlu0 %v530, 8
      %v594 = vpop.permute.xlu0 %593
      %629 = vrot.lane.b32.xlu0 %v174, 12
      %v630 = vpop.permute.xlu0 %629
      %631 = vrot.lane.b32.xlu0 %v175, 12
      %v632 = vpop.permute.xlu0 %631
      %633 = vrot.lane.b32.xlu0 %v177, 12
      %v634 = vpop.permute.xlu0 %633
      %635 = vrot.lane.b32.xlu0 %v178, 12
      %v636 = vpop.permute.xlu0 %635
      %637 = vrot.lane.b32.xlu0 %v180, 12
      %v638 = vpop.permute.xlu0 %637
      %639 = vrot.lane.b32.xlu0 %v181, 12
      %v640 = vpop.permute.xlu0 %639
      %641 = vrot.lane.b32.xlu0 %v183, 12
      %v642 = vpop.permute.xlu0 %641
      %643 = vrot.lane.b32.xlu0 %v184, 12
      %v644 = vpop.permute.xlu0 %643
      %645 = vrot.lane.b32.xlu0 %v186, 12
      %v646 = vpop.permute.xlu0 %645
      %647 = vrot.lane.b32.xlu0 %v187, 12
      %v648 = vpop.permute.xlu0 %647
      %649 = vrot.lane.b32.xlu0 %v189, 12
      %v650 = vpop.permute.xlu0 %649
      %651 = vrot.lane.b32.xlu0 %v190, 12
      %v652 = vpop.permute.xlu0 %651
      %653 = vrot.lane.b32.xlu0 %v192, 12
      %v654 = vpop.permute.xlu0 %653
      %655 = vrot.lane.b32.xlu0 %v193, 12
      %v656 = vpop.permute.xlu0 %655
      %657 = vrot.lane.b32.xlu0 %v195, 12
      %v658 = vpop.permute.xlu0 %657
      %659 = vrot.lane.b32.xlu0 %v196, 12
      %v660 = vpop.permute.xlu0 %659
      %661 = vrot.lane.b32.xlu0 %v198, 12
      %v662 = vpop.permute.xlu0 %661
      %663 = vrot.lane.b32.xlu0 %v199, 12
      %v664 = vpop.permute.xlu0 %663
      %665 = vrot.lane.b32.xlu0 %v201, 12
      %v666 = vpop.permute.xlu0 %665
      %667 = vrot.lane.b32.xlu0 %v202, 12
      %v668 = vpop.permute.xlu0 %667
      %669 = vrot.lane.b32.xlu0 %v204, 12
      %v670 = vpop.permute.xlu0 %669
      %671 = vrot.lane.b32.xlu0 %v205, 12
      %v672 = vpop.permute.xlu0 %671
      %673 = vrot.lane.b32.xlu0 %v207, 12
      %v674 = vpop.permute.xlu0 %673
      %675 = vrot.lane.b32.xlu0 %v208, 12
      %v676 = vpop.permute.xlu0 %675
      %677 = vrot.lane.b32.xlu0 %v210, 12
      %v678 = vpop.permute.xlu0 %677
      %679 = vrot.lane.b32.xlu0 %v211, 12
      %v680 = vpop.permute.xlu0 %679
      %681 = vrot.lane.b32.xlu0 %v213, 12
      %v682 = vpop.permute.xlu0 %681
      %683 = vrot.lane.b32.xlu0 %v214, 12
      %v684 = vpop.permute.xlu0 %683
      %685 = vrot.lane.b32.xlu0 %v216, 12
      %v686 = vpop.permute.xlu0 %685
      %687 = vrot.lane.b32.xlu0 %v217, 12
      %v688 = vpop.permute.xlu0 %687
      %689 = vrot.lane.b32.xlu0 %v219, 12
      %v690 = vpop.permute.xlu0 %689
      %691 = vrot.lane.b32.xlu0 %v220, 12
      %v692 = vpop.permute.xlu0 %691
      %v726 = vrot.slane %v219, 1
      %v727 = vrot.slane %v220, 1
      %v728 = vsel %vm273, %v726, %v727
      %v729 = vrot.slane %v221, 1
      %v730 = vsel %vm273, %v727, %v729
      %731 = vrot.lane.b32.xlu0 %v281, 16
      %v732 = vpop.permute.xlu0 %731
      %733 = vrot.lane.b32.xlu0 %v283, 16
      %v734 = vpop.permute.xlu0 %733
      %735 = vrot.lane.b32.xlu0 %v286, 16
      %v736 = vpop.permute.xlu0 %735
      %737 = vrot.lane.b32.xlu0 %v288, 16
      %v738 = vpop.permute.xlu0 %737
      %739 = vrot.lane.b32.xlu0 %v291, 16
      %v740 = vpop.permute.xlu0 %739
      %741 = vrot.lane.b32.xlu0 %v293, 16
      %v742 = vpop.permute.xlu0 %741
      %743 = vrot.lane.b32.xlu0 %v296, 16
      %v744 = vpop.permute.xlu0 %743
      %745 = vrot.lane.b32.xlu0 %v298, 16
      %v746 = vpop.permute.xlu0 %745
      %747 = vrot.lane.b32.xlu0 %v301, 16
      %v748 = vpop.permute.xlu0 %747
      %749 = vrot.lane.b32.xlu0 %v303, 16
      %v750 = vpop.permute.xlu0 %749
      %751 = vrot.lane.b32.xlu0 %v306, 16
      %v752 = vpop.permute.xlu0 %751
      %753 = vrot.lane.b32.xlu0 %v308, 16
      %v754 = vpop.permute.xlu0 %753
      %755 = vrot.lane.b32.xlu0 %v311, 16
      %v756 = vpop.permute.xlu0 %755
      %757 = vrot.lane.b32.xlu0 %v313, 16
      %v758 = vpop.permute.xlu0 %757
      %759 = vrot.lane.b32.xlu0 %v316, 16
      %v760 = vpop.permute.xlu0 %759
      %761 = vrot.lane.b32.xlu0 %v318, 16
      %v762 = vpop.permute.xlu0 %761
      %763 = vrot.lane.b32.xlu0 %v321, 16
      %v764 = vpop.permute.xlu0 %763
      %765 = vrot.lane.b32.xlu0 %v323, 16
      %v766 = vpop.permute.xlu0 %765
      %767 = vrot.lane.b32.xlu0 %v326, 16
      %v768 = vpop.permute.xlu0 %767
      %769 = vrot.lane.b32.xlu0 %v328, 16
      %v770 = vpop.permute.xlu0 %769
      %771 = vrot.lane.b32.xlu0 %v331, 16
      %v772 = vpop.permute.xlu0 %771
      %773 = vrot.lane.b32.xlu0 %v333, 16
      %v774 = vpop.permute.xlu0 %773
      %775 = vrot.lane.b32.xlu0 %v336, 16
      %v776 = vpop.permute.xlu0 %775
      %777 = vrot.lane.b32.xlu0 %v338, 16
      %v778 = vpop.permute.xlu0 %777
      %779 = vrot.lane.b32.xlu0 %v341, 16
      %v780 = vpop.permute.xlu0 %779
      %781 = vrot.lane.b32.xlu0 %v343, 16
      %v782 = vpop.permute.xlu0 %781
      %783 = vrot.lane.b32.xlu0 %v346, 16
      %v784 = vpop.permute.xlu0 %783
      %785 = vrot.lane.b32.xlu0 %v348, 16
      %v786 = vpop.permute.xlu0 %785
      %787 = vrot.lane.b32.xlu0 %v351, 16
      %v788 = vpop.permute.xlu0 %787
      %789 = vrot.lane.b32.xlu0 %v353, 16
      %v790 = vpop.permute.xlu0 %789
      %791 = vrot.lane.b32.xlu0 %v728, 16
      %v792 = vpop.permute.xlu0 %791
      %793 = vrot.lane.b32.xlu0 %v730, 16
      %v794 = vpop.permute.xlu0 %793
      %v827 = vrot.slane %v219, 2
      %v828 = vrot.slane %v220, 2
      %v829 = vsel %vm450, %v827, %v828
      %v830 = vrot.slane %v221, 2
      %v831 = vsel %vm450, %v828, %v830
      %832 = vrot.lane.b32.xlu0 %v458, 20
      %v833 = vpop.permute.xlu0 %832
      %834 = vrot.lane.b32.xlu0 %v460, 20
      %v835 = vpop.permute.xlu0 %834
      %836 = vrot.lane.b32.xlu0 %v463, 20
      %v837 = vpop.permute.xlu0 %836
      %838 = vrot.lane.b32.xlu0 %v465, 20
      %v839 = vpop.permute.xlu0 %838
      %840 = vrot.lane.b32.xlu0 %v468, 20
      %v841 = vpop.permute.xlu0 %840
      %842 = vrot.lane.b32.xlu0 %v470, 20
      %v843 = vpop.permute.xlu0 %842
      %844 = vrot.lane.b32.xlu0 %v473, 20
      %v845 = vpop.permute.xlu0 %844
      %846 = vrot.lane.b32.xlu0 %v475, 20
      %v847 = vpop.permute.xlu0 %846
      %848 = vrot.lane.b32.xlu0 %v478, 20
      %v849 = vpop.permute.xlu0 %848
      %850 = vrot.lane.b32.xlu0 %v480, 20
      %v851 = vpop.permute.xlu0 %850
      %852 = vrot.lane.b32.xlu0 %v483, 20
      %v853 = vpop.permute.xlu0 %852
      %854 = vrot.lane.b32.xlu0 %v485, 20
      %v855 = vpop.permute.xlu0 %854
      %856 = vrot.lane.b32.xlu0 %v488, 20
      %v857 = vpop.permute.xlu0 %856
      %858 = vrot.lane.b32.xlu0 %v490, 20
      %v859 = vpop.permute.xlu0 %858
      %860 = vrot.lane.b32.xlu0 %v493, 20
      %v861 = vpop.permute.xlu0 %860
      %862 = vrot.lane.b32.xlu0 %v495, 20
      %v863 = vpop.permute.xlu0 %862
      %864 = vrot.lane.b32.xlu0 %v498, 20
      %v865 = vpop.permute.xlu0 %864
      %866 = vrot.lane.b32.xlu0 %v500, 20
      %v867 = vpop.permute.xlu0 %866
      %868 = vrot.lane.b32.xlu0 %v503, 20
      %v869 = vpop.permute.xlu0 %868
      %870 = vrot.lane.b32.xlu0 %v505, 20
      %v871 = vpop.permute.xlu0 %870
      %872 = vrot.lane.b32.xlu0 %v508, 20
      %v873 = vpop.permute.xlu0 %872
      %874 = vrot.lane.b32.xlu0 %v510, 20
      %v875 = vpop.permute.xlu0 %874
      %876 = vrot.lane.b32.xlu0 %v513, 20
      %v877 = vpop.permute.xlu0 %876
      %878 = vrot.lane.b32.xlu0 %v515, 20
      %v879 = vpop.permute.xlu0 %878
      %880 = vrot.lane.b32.xlu0 %v518, 20
      %v881 = vpop.permute.xlu0 %880
      %882 = vrot.lane.b32.xlu0 %v520, 20
      %v883 = vpop.permute.xlu0 %882
      %884 = vrot.lane.b32.xlu0 %v523, 20
      %v885 = vpop.permute.xlu0 %884
      %886 = vrot.lane.b32.xlu0 %v525, 20
      %v887 = vpop.permute.xlu0 %886
      %888 = vrot.lane.b32.xlu0 %v528, 20
      %v889 = vpop.permute.xlu0 %888
      %890 = vrot.lane.b32.xlu0 %v530, 20
      %v891 = vpop.permute.xlu0 %890
      %892 = vrot.lane.b32.xlu0 %v829, 20
      %v893 = vpop.permute.xlu0 %892
      %894 = vrot.lane.b32.xlu0 %v831, 20
      %v895 = vpop.permute.xlu0 %894
      %930 = vrot.lane.b32.xlu0 %v177, 24
      %v931 = vpop.permute.xlu0 %930
      %932 = vrot.lane.b32.xlu0 %v178, 24
      %v933 = vpop.permute.xlu0 %932
      %934 = vrot.lane.b32.xlu0 %v180, 24
      %v935 = vpop.permute.xlu0 %934
      %936 = vrot.lane.b32.xlu0 %v181, 24
      %v937 = vpop.permute.xlu0 %936
      %938 = vrot.lane.b32.xlu0 %v183, 24
      %v939 = vpop.permute.xlu0 %938
      %940 = vrot.lane.b32.xlu0 %v184, 24
      %v941 = vpop.permute.xlu0 %940
      %942 = vrot.lane.b32.xlu0 %v186, 24
      %v943 = vpop.permute.xlu0 %942
      %944 = vrot.lane.b32.xlu0 %v187, 24
      %v945 = vpop.permute.xlu0 %944
      %946 = vrot.lane.b32.xlu0 %v189, 24
      %v947 = vpop.permute.xlu0 %946
      %948 = vrot.lane.b32.xlu0 %v190, 24
      %v949 = vpop.permute.xlu0 %948
      %950 = vrot.lane.b32.xlu0 %v192, 24
      %v951 = vpop.permute.xlu0 %950
      %952 = vrot.lane.b32.xlu0 %v193, 24
      %v953 = vpop.permute.xlu0 %952
      %954 = vrot.lane.b32.xlu0 %v195, 24
      %v955 = vpop.permute.xlu0 %954
      %956 = vrot.lane.b32.xlu0 %v196, 24
      %v957 = vpop.permute.xlu0 %956
      %958 = vrot.lane.b32.xlu0 %v198, 24
      %v959 = vpop.permute.xlu0 %958
      %960 = vrot.lane.b32.xlu0 %v199, 24
      %v961 = vpop.permute.xlu0 %960
      %962 = vrot.lane.b32.xlu0 %v201, 24
      %v963 = vpop.permute.xlu0 %962
      %964 = vrot.lane.b32.xlu0 %v202, 24
      %v965 = vpop.permute.xlu0 %964
      %966 = vrot.lane.b32.xlu0 %v204, 24
      %v967 = vpop.permute.xlu0 %966
      %968 = vrot.lane.b32.xlu0 %v205, 24
      %v969 = vpop.permute.xlu0 %968
      %970 = vrot.lane.b32.xlu0 %v207, 24
      %v971 = vpop.permute.xlu0 %970
      %972 = vrot.lane.b32.xlu0 %v208, 24
      %v973 = vpop.permute.xlu0 %972
      %974 = vrot.lane.b32.xlu0 %v210, 24
      %v975 = vpop.permute.xlu0 %974
      %976 = vrot.lane.b32.xlu0 %v211, 24
      %v977 = vpop.permute.xlu0 %976
      %978 = vrot.lane.b32.xlu0 %v213, 24
      %v979 = vpop.permute.xlu0 %978
      %980 = vrot.lane.b32.xlu0 %v214, 24
      %v981 = vpop.permute.xlu0 %980
      %982 = vrot.lane.b32.xlu0 %v216, 24
      %v983 = vpop.permute.xlu0 %982
      %984 = vrot.lane.b32.xlu0 %v217, 24
      %v985 = vpop.permute.xlu0 %984
      %986 = vrot.lane.b32.xlu0 %v219, 24
      %v987 = vpop.permute.xlu0 %986
      %988 = vrot.lane.b32.xlu0 %v220, 24
      %v989 = vpop.permute.xlu0 %988
      %990 = vrot.lane.b32.xlu0 %v222, 24
      %v991 = vpop.permute.xlu0 %990
      %992 = vrot.lane.b32.xlu0 %v223, 24
      %v993 = vpop.permute.xlu0 %992
      %v1027 = vrot.slane %v222, 1
      %v1028 = vrot.slane %v223, 1
      %v1029 = vsel %vm273, %v1027, %v1028
      %v1030 = vrot.slane %v224, 1
      %v1031 = vsel %vm273, %v1028, %v1030
      %1032 = vrot.lane.b32.xlu0 %v286, 28
      %v1033 = vpop.permute.xlu0 %1032
      %1034 = vrot.lane.b32.xlu0 %v288, 28
      %v1035 = vpop.permute.xlu0 %1034
      %1036 = vrot.lane.b32.xlu0 %v291, 28
      %v1037 = vpop.permute.xlu0 %1036
      %1038 = vrot.lane.b32.xlu0 %v293, 28
      %v1039 = vpop.permute.xlu0 %1038
      %1040 = vrot.lane.b32.xlu0 %v296, 28
      %v1041 = vpop.permute.xlu0 %1040
      %1042 = vrot.lane.b32.xlu0 %v298, 28
      %v1043 = vpop.permute.xlu0 %1042
      %1044 = vrot.lane.b32.xlu0 %v301, 28
      %v1045 = vpop.permute.xlu0 %1044
      %1046 = vrot.lane.b32.xlu0 %v303, 28
      %v1047 = vpop.permute.xlu0 %1046
      %1048 = vrot.lane.b32.xlu0 %v306, 28
      %v1049 = vpop.permute.xlu0 %1048
      %1050 = vrot.lane.b32.xlu0 %v308, 28
      %v1051 = vpop.permute.xlu0 %1050
      %1052 = vrot.lane.b32.xlu0 %v311, 28
      %v1053 = vpop.permute.xlu0 %1052
      %1054 = vrot.lane.b32.xlu0 %v313, 28
      %v1055 = vpop.permute.xlu0 %1054
      %1056 = vrot.lane.b32.xlu0 %v316, 28
      %v1057 = vpop.permute.xlu0 %1056
      %1058 = vrot.lane.b32.xlu0 %v318, 28
      %v1059 = vpop.permute.xlu0 %1058
      %1060 = vrot.lane.b32.xlu0 %v321, 28
      %v1061 = vpop.permute.xlu0 %1060
      %1062 = vrot.lane.b32.xlu0 %v323, 28
      %v1063 = vpop.permute.xlu0 %1062
      %1064 = vrot.lane.b32.xlu0 %v326, 28
      %v1065 = vpop.permute.xlu0 %1064
      %1066 = vrot.lane.b32.xlu0 %v328, 28
      %v1067 = vpop.permute.xlu0 %1066
      %1068 = vrot.lane.b32.xlu0 %v331, 28
      %v1069 = vpop.permute.xlu0 %1068
      %1070 = vrot.lane.b32.xlu0 %v333, 28
      %v1071 = vpop.permute.xlu0 %1070
      %1072 = vrot.lane.b32.xlu0 %v336, 28
      %v1073 = vpop.permute.xlu0 %1072
      %1074 = vrot.lane.b32.xlu0 %v338, 28
      %v1075 = vpop.permute.xlu0 %1074
      %1076 = vrot.lane.b32.xlu0 %v341, 28
      %v1077 = vpop.permute.xlu0 %1076
      %1078 = vrot.lane.b32.xlu0 %v343, 28
      %v1079 = vpop.permute.xlu0 %1078
      %1080 = vrot.lane.b32.xlu0 %v346, 28
      %v1081 = vpop.permute.xlu0 %1080
      %1082 = vrot.lane.b32.xlu0 %v348, 28
      %v1083 = vpop.permute.xlu0 %1082
      %1084 = vrot.lane.b32.xlu0 %v351, 28
      %v1085 = vpop.permute.xlu0 %1084
      %1086 = vrot.lane.b32.xlu0 %v353, 28
      %v1087 = vpop.permute.xlu0 %1086
      %1088 = vrot.lane.b32.xlu0 %v728, 28
      %v1089 = vpop.permute.xlu0 %1088
      %1090 = vrot.lane.b32.xlu0 %v730, 28
      %v1091 = vpop.permute.xlu0 %1090
      %1092 = vrot.lane.b32.xlu0 %v1029, 28
      %v1093 = vpop.permute.xlu0 %1092
      %1094 = vrot.lane.b32.xlu0 %v1031, 28
      %v1095 = vpop.permute.xlu0 %1094
      %v1128 = vrot.slane %v222, 2
      %v1129 = vrot.slane %v223, 2
      %v1130 = vsel %vm450, %v1128, %v1129
      %v1131 = vrot.slane %v224, 2
      %v1132 = vsel %vm450, %v1129, %v1131
      %1133 = vrot.lane.b32.xlu0 %v463, 32
      %v1134 = vpop.permute.xlu0 %1133
      %1135 = vrot.lane.b32.xlu0 %v465, 32
      %v1136 = vpop.permute.xlu0 %1135
      %1137 = vrot.lane.b32.xlu0 %v468, 32
      %v1138 = vpop.permute.xlu0 %1137
      %1139 = vrot.lane.b32.xlu0 %v470, 32
      %v1140 = vpop.permute.xlu0 %1139
      %1141 = vrot.lane.b32.xlu0 %v473, 32
      %v1142 = vpop.permute.xlu0 %1141
      %1143 = vrot.lane.b32.xlu0 %v475, 32
      %v1144 = vpop.permute.xlu0 %1143
      %1145 = vrot.lane.b32.xlu0 %v478, 32
      %v1146 = vpop.permute.xlu0 %1145
      %1147 = vrot.lane.b32.xlu0 %v480, 32
      %v1148 = vpop.permute.xlu0 %1147
      %1149 = vrot.lane.b32.xlu0 %v483, 32
      %v1150 = vpop.permute.xlu0 %1149
      %1151 = vrot.lane.b32.xlu0 %v485, 32
      %v1152 = vpop.permute.xlu0 %1151
      %1153 = vrot.lane.b32.xlu0 %v488, 32
      %v1154 = vpop.permute.xlu0 %1153
      %1155 = vrot.lane.b32.xlu0 %v490, 32
      %v1156 = vpop.permute.xlu0 %1155
      %1157 = vrot.lane.b32.xlu0 %v493, 32
      %v1158 = vpop.permute.xlu0 %1157
      %1159 = vrot.lane.b32.xlu0 %v495, 32
      %v1160 = vpop.permute.xlu0 %1159
      %1161 = vrot.lane.b32.xlu0 %v498, 32
      %v1162 = vpop.permute.xlu0 %1161
      %1163 = vrot.lane.b32.xlu0 %v500, 32
      %v1164 = vpop.permute.xlu0 %1163
      %1165 = vrot.lane.b32.xlu0 %v503, 32
      %v1166 = vpop.permute.xlu0 %1165
      %1167 = vrot.lane.b32.xlu0 %v505, 32
      %v1168 = vpop.permute.xlu0 %1167
      %1169 = vrot.lane.b32.xlu0 %v508, 32
      %v1170 = vpop.permute.xlu0 %1169
      %1171 = vrot.lane.b32.xlu0 %v510, 32
      %v1172 = vpop.permute.xlu0 %1171
      %1173 = vrot.lane.b32.xlu0 %v513, 32
      %v1174 = vpop.permute.xlu0 %1173
      %1175 = vrot.lane.b32.xlu0 %v515, 32
      %v1176 = vpop.permute.xlu0 %1175
      %1177 = vrot.lane.b32.xlu0 %v518, 32
      %v1178 = vpop.permute.xlu0 %1177
      %1179 = vrot.lane.b32.xlu0 %v520, 32
      %v1180 = vpop.permute.xlu0 %1179
      %1181 = vrot.lane.b32.xlu0 %v523, 32
      %v1182 = vpop.permute.xlu0 %1181
      %1183 = vrot.lane.b32.xlu0 %v525, 32
      %v1184 = vpop.permute.xlu0 %1183
      %1185 = vrot.lane.b32.xlu0 %v528, 32
      %v1186 = vpop.permute.xlu0 %1185
      %1187 = vrot.lane.b32.xlu0 %v530, 32
      %v1188 = vpop.permute.xlu0 %1187
      %1189 = vrot.lane.b32.xlu0 %v829, 32
      %v1190 = vpop.permute.xlu0 %1189
      %1191 = vrot.lane.b32.xlu0 %v831, 32
      %v1192 = vpop.permute.xlu0 %1191
      %1193 = vrot.lane.b32.xlu0 %v1130, 32
      %v1194 = vpop.permute.xlu0 %1193
      %1195 = vrot.lane.b32.xlu0 %v1132, 32
      %v1196 = vpop.permute.xlu0 %1195
      %vm1229 = vcmask 31744
      %v1230 = vsel %vm1229, %v171, %v355
      %v1231 = vsel %vm1229, %v172, %v357
      %v1232 = vsel %vm1229, %v174, %v359
      %v1233 = vsel %vm1229, %v175, %v361
      %v1234 = vsel %vm1229, %v177, %v363
      %v1235 = vsel %vm1229, %v178, %v365
      %v1236 = vsel %vm1229, %v180, %v367
      %v1237 = vsel %vm1229, %v181, %v369
      %v1238 = vsel %vm1229, %v183, %v371
      %v1239 = vsel %vm1229, %v184, %v373
      %v1240 = vsel %vm1229, %v186, %v375
      %v1241 = vsel %vm1229, %v187, %v377
      %v1242 = vsel %vm1229, %v189, %v379
      %v1243 = vsel %vm1229, %v190, %v381
      %v1244 = vsel %vm1229, %v192, %v383
      %v1245 = vsel %vm1229, %v193, %v385
      %v1246 = vsel %vm1229, %v195, %v387
      %v1247 = vsel %vm1229, %v196, %v389
      %v1248 = vsel %vm1229, %v198, %v391
      %v1249 = vsel %vm1229, %v199, %v393
      %v1250 = vsel %vm1229, %v201, %v395
      %v1251 = vsel %vm1229, %v202, %v397
      %v1252 = vsel %vm1229, %v204, %v399
      %v1253 = vsel %vm1229, %v205, %v401
      %v1254 = vsel %vm1229, %v207, %v403
      %v1255 = vsel %vm1229, %v208, %v405
      %v1256 = vsel %vm1229, %v210, %v407
      %v1257 = vsel %vm1229, %v211, %v409
      %v1258 = vsel %vm1229, %v213, %v411
      %v1259 = vsel %vm1229, %v214, %v413
      %v1260 = vsel %vm1229, %v216, %v415
      %v1261 = vsel %vm1229, %v217, %v417
      %vm1262 = vcmask 64512
      %v1263 = vsel %vm1262, %v1230, %v532
      %v1264 = vsel %vm1262, %v1231, %v534
      %v1265 = vsel %vm1262, %v1232, %v536
      %v1266 = vsel %vm1262, %v1233, %v538
      %v1267 = vsel %vm1262, %v1234, %v540
      %v1268 = vsel %vm1262, %v1235, %v542
      %v1269 = vsel %vm1262, %v1236, %v544
      %v1270 = vsel %vm1262, %v1237, %v546
      %v1271 = vsel %vm1262, %v1238, %v548
      %v1272 = vsel %vm1262, %v1239, %v550
      %v1273 = vsel %vm1262, %v1240, %v552
      %v1274 = vsel %vm1262, %v1241, %v554
      %v1275 = vsel %vm1262, %v1242, %v556
      %v1276 = vsel %vm1262, %v1243, %v558
      %v1277 = vsel %vm1262, %v1244, %v560
      %v1278 = vsel %vm1262, %v1245, %v562
      %v1279 = vsel %vm1262, %v1246, %v564
      %v1280 = vsel %vm1262, %v1247, %v566
      %v1281 = vsel %vm1262, %v1248, %v568
      %v1282 = vsel %vm1262, %v1249, %v570
      %v1283 = vsel %vm1262, %v1250, %v572
      %v1284 = vsel %vm1262, %v1251, %v574
      %v1285 = vsel %vm1262, %v1252, %v576
      %v1286 = vsel %vm1262, %v1253, %v578
      %v1287 = vsel %vm1262, %v1254, %v580
      %v1288 = vsel %vm1262, %v1255, %v582
      %v1289 = vsel %vm1262, %v1256, %v584
      %v1290 = vsel %vm1262, %v1257, %v586
      %v1291 = vsel %vm1262, %v1258, %v588
      %v1292 = vsel %vm1262, %v1259, %v590
      %v1293 = vsel %vm1262, %v1260, %v592
      %v1294 = vsel %vm1262, %v1261, %v594
      %vm1295 = vcmask 97280
      %v1296 = vsel %vm1295, %v1263, %v630
      %v1297 = vsel %vm1295, %v1264, %v632
      %v1298 = vsel %vm1295, %v1265, %v634
      %v1299 = vsel %vm1295, %v1266, %v636
      %v1300 = vsel %vm1295, %v1267, %v638
      %v1301 = vsel %vm1295, %v1268, %v640
      %v1302 = vsel %vm1295, %v1269, %v642
      %v1303 = vsel %vm1295, %v1270, %v644
      %v1304 = vsel %vm1295, %v1271, %v646
      %v1305 = vsel %vm1295, %v1272, %v648
      %v1306 = vsel %vm1295, %v1273, %v650
      %v1307 = vsel %vm1295, %v1274, %v652
      %v1308 = vsel %vm1295, %v1275, %v654
      %v1309 = vsel %vm1295, %v1276, %v656
      %v1310 = vsel %vm1295, %v1277, %v658
      %v1311 = vsel %vm1295, %v1278, %v660
      %v1312 = vsel %vm1295, %v1279, %v662
      %v1313 = vsel %vm1295, %v1280, %v664
      %v1314 = vsel %vm1295, %v1281, %v666
      %v1315 = vsel %vm1295, %v1282, %v668
      %v1316 = vsel %vm1295, %v1283, %v670
      %v1317 = vsel %vm1295, %v1284, %v672
      %v1318 = vsel %vm1295, %v1285, %v674
      %v1319 = vsel %vm1295, %v1286, %v676
      %v1320 = vsel %vm1295, %v1287, %v678
      %v1321 = vsel %vm1295, %v1288, %v680
      %v1322 = vsel %vm1295, %v1289, %v682
      %v1323 = vsel %vm1295, %v1290, %v684
      %v1324 = vsel %vm1295, %v1291, %v686
      %v1325 = vsel %vm1295, %v1292, %v688
      %v1326 = vsel %vm1295, %v1293, %v690
      %v1327 = vsel %vm1295, %v1294, %v692
      %vm1328 = vcmask 130048
      %v1329 = vsel %vm1328, %v1296, %v732
      %v1330 = vsel %vm1328, %v1297, %v734
      %v1331 = vsel %vm1328, %v1298, %v736
      %v1332 = vsel %vm1328, %v1299, %v738
      %v1333 = vsel %vm1328, %v1300, %v740
      %v1334 = vsel %vm1328, %v1301, %v742
      %v1335 = vsel %vm1328, %v1302, %v744
      %v1336 = vsel %vm1328, %v1303, %v746
      %v1337 = vsel %vm1328, %v1304, %v748
      %v1338 = vsel %vm1328, %v1305, %v750
      %v1339 = vsel %vm1328, %v1306, %v752
      %v1340 = vsel %vm1328, %v1307, %v754
      %v1341 = vsel %vm1328, %v1308, %v756
      %v1342 = vsel %vm1328, %v1309, %v758
      %v1343 = vsel %vm1328, %v1310, %v760
      %v1344 = vsel %vm1328, %v1311, %v762
      %v1345 = vsel %vm1328, %v1312, %v764
      %v1346 = vsel %vm1328, %v1313, %v766
      %v1347 = vsel %vm1328, %v1314, %v768
      %v1348 = vsel %vm1328, %v1315, %v770
      %v1349 = vsel %vm1328, %v1316, %v772
      %v1350 = vsel %vm1328, %v1317, %v774
      %v1351 = vsel %vm1328, %v1318, %v776
      %v1352 = vsel %vm1328, %v1319, %v778
      %v1353 = vsel %vm1328, %v1320, %v780
      %v1354 = vsel %vm1328, %v1321, %v782
      %v1355 = vsel %vm1328, %v1322, %v784
      %v1356 = vsel %vm1328, %v1323, %v786
      %v1357 = vsel %vm1328, %v1324, %v788
      %v1358 = vsel %vm1328, %v1325, %v790
      %v1359 = vsel %vm1328, %v1326, %v792
      %v1360 = vsel %vm1328, %v1327, %v794
      %vm1361 = vcmask 162816
      %v1362 = vsel %vm1361, %v1329, %v833
      %v1363 = vsel %vm1361, %v1330, %v835
      %v1364 = vsel %vm1361, %v1331, %v837
      %v1365 = vsel %vm1361, %v1332, %v839
      %v1366 = vsel %vm1361, %v1333, %v841
      %v1367 = vsel %vm1361, %v1334, %v843
      %v1368 = vsel %vm1361, %v1335, %v845
      %v1369 = vsel %vm1361, %v1336, %v847
      %v1370 = vsel %vm1361, %v1337, %v849
      %v1371 = vsel %vm1361, %v1338, %v851
      %v1372 = vsel %vm1361, %v1339, %v853
      %v1373 = vsel %vm1361, %v1340, %v855
      %v1374 = vsel %vm1361, %v1341, %v857
      %v1375 = vsel %vm1361, %v1342, %v859
      %v1376 = vsel %vm1361, %v1343, %v861
      %v1377 = vsel %vm1361, %v1344, %v863
      %v1378 = vsel %vm1361, %v1345, %v865
      %v1379 = vsel %vm1361, %v1346, %v867
      %v1380 = vsel %vm1361, %v1347, %v869
      %v1381 = vsel %vm1361, %v1348, %v871
      %v1382 = vsel %vm1361, %v1349, %v873
      %v1383 = vsel %vm1361, %v1350, %v875
      %v1384 = vsel %vm1361, %v1351, %v877
      %v1385 = vsel %vm1361, %v1352, %v879
      %v1386 = vsel %vm1361, %v1353, %v881
      %v1387 = vsel %vm1361, %v1354, %v883
      %v1388 = vsel %vm1361, %v1355, %v885
      %v1389 = vsel %vm1361, %v1356, %v887
      %v1390 = vsel %vm1361, %v1357, %v889
      %v1391 = vsel %vm1361, %v1358, %v891
      %v1392 = vsel %vm1361, %v1359, %v893
      %v1393 = vsel %vm1361, %v1360, %v895
      %vm1394 = vcmask 195584
      %v1395 = vsel %vm1394, %v1362, %v931
      %v1396 = vsel %vm1394, %v1363, %v933
      %v1397 = vsel %vm1394, %v1364, %v935
      %v1398 = vsel %vm1394, %v1365, %v937
      %v1399 = vsel %vm1394, %v1366, %v939
      %v1400 = vsel %vm1394, %v1367, %v941
      %v1401 = vsel %vm1394, %v1368, %v943
      %v1402 = vsel %vm1394, %v1369, %v945
      %v1403 = vsel %vm1394, %v1370, %v947
      %v1404 = vsel %vm1394, %v1371, %v949
      %v1405 = vsel %vm1394, %v1372, %v951
      %v1406 = vsel %vm1394, %v1373, %v953
      %v1407 = vsel %vm1394, %v1374, %v955
      %v1408 = vsel %vm1394, %v1375, %v957
      %v1409 = vsel %vm1394, %v1376, %v959
      %v1410 = vsel %vm1394, %v1377, %v961
      %v1411 = vsel %vm1394, %v1378, %v963
      %v1412 = vsel %vm1394, %v1379, %v965
      %v1413 = vsel %vm1394, %v1380, %v967
      %v1414 = vsel %vm1394, %v1381, %v969
      %v1415 = vsel %vm1394, %v1382, %v971
      %v1416 = vsel %vm1394, %v1383, %v973
      %v1417 = vsel %vm1394, %v1384, %v975
      %v1418 = vsel %vm1394, %v1385, %v977
      %v1419 = vsel %vm1394, %v1386, %v979
      %v1420 = vsel %vm1394, %v1387, %v981
      %v1421 = vsel %vm1394, %v1388, %v983
      %v1422 = vsel %vm1394, %v1389, %v985
      %v1423 = vsel %vm1394, %v1390, %v987
      %v1424 = vsel %vm1394, %v1391, %v989
      %v1425 = vsel %vm1394, %v1392, %v991
      %v1426 = vsel %vm1394, %v1393, %v993
      %vm1427 = vcmask 228352
      %v1428 = vsel %vm1427, %v1395, %v1033
      %v1429 = vsel %vm1427, %v1396, %v1035
      %v1430 = vsel %vm1427, %v1397, %v1037
      %v1431 = vsel %vm1427, %v1398, %v1039
      %v1432 = vsel %vm1427, %v1399, %v1041
      %v1433 = vsel %vm1427, %v1400, %v1043
      %v1434 = vsel %vm1427, %v1401, %v1045
      %v1435 = vsel %vm1427, %v1402, %v1047
      %v1436 = vsel %vm1427, %v1403, %v1049
      %v1437 = vsel %vm1427, %v1404, %v1051
      %v1438 = vsel %vm1427, %v1405, %v1053
      %v1439 = vsel %vm1427, %v1406, %v1055
      %v1440 = vsel %vm1427, %v1407, %v1057
      %v1441 = vsel %vm1427, %v1408, %v1059
      %v1442 = vsel %vm1427, %v1409, %v1061
      %v1443 = vsel %vm1427, %v1410, %v1063
      %v1444 = vsel %vm1427, %v1411, %v1065
      %v1445 = vsel %vm1427, %v1412, %v1067
      %v1446 = vsel %vm1427, %v1413, %v1069
      %v1447 = vsel %vm1427, %v1414, %v1071
      %v1448 = vsel %vm1427, %v1415, %v1073
      %v1449 = vsel %vm1427, %v1416, %v1075
      %v1450 = vsel %vm1427, %v1417, %v1077
      %v1451 = vsel %vm1427, %v1418, %v1079
      %v1452 = vsel %vm1427, %v1419, %v1081
      %v1453 = vsel %vm1427, %v1420, %v1083
      %v1454 = vsel %vm1427, %v1421, %v1085
      %v1455 = vsel %vm1427, %v1422, %v1087
      %v1456 = vsel %vm1427, %v1423, %v1089
      %v1457 = vsel %vm1427, %v1424, %v1091
      %v1458 = vsel %vm1427, %v1425, %v1093
      %v1459 = vsel %vm1427, %v1426, %v1095
      %vm1460 = vcmask 261120
      %v1461 = vsel %vm1460, %v1428, %v1134
      %v1462 = vsel %vm1460, %v1429, %v1136
      %v1463 = vsel %vm1460, %v1430, %v1138
      %v1464 = vsel %vm1460, %v1431, %v1140
      %v1465 = vsel %vm1460, %v1432, %v1142
      %v1466 = vsel %vm1460, %v1433, %v1144
      %v1467 = vsel %vm1460, %v1434, %v1146
      %v1468 = vsel %vm1460, %v1435, %v1148
      %v1469 = vsel %vm1460, %v1436, %v1150
      %v1470 = vsel %vm1460, %v1437, %v1152
      %v1471 = vsel %vm1460, %v1438, %v1154
      %v1472 = vsel %vm1460, %v1439, %v1156
      %v1473 = vsel %vm1460, %v1440, %v1158
      %v1474 = vsel %vm1460, %v1441, %v1160
      %v1475 = vsel %vm1460, %v1442, %v1162
      %v1476 = vsel %vm1460, %v1443, %v1164
      %v1477 = vsel %vm1460, %v1444, %v1166
      %v1478 = vsel %vm1460, %v1445, %v1168
      %v1479 = vsel %vm1460, %v1446, %v1170
      %v1480 = vsel %vm1460, %v1447, %v1172
      %v1481 = vsel %vm1460, %v1448, %v1174
      %v1482 = vsel %vm1460, %v1449, %v1176
      %v1483 = vsel %vm1460, %v1450, %v1178
      %v1484 = vsel %vm1460, %v1451, %v1180
      %v1485 = vsel %vm1460, %v1452, %v1182
      %v1486 = vsel %vm1460, %v1453, %v1184
      %v1487 = vsel %vm1460, %v1454, %v1186
      %v1488 = vsel %vm1460, %v1455, %v1188
      %v1489 = vsel %vm1460, %v1456, %v1190
      %v1490 = vsel %vm1460, %v1457, %v1192
      %v1491 = vsel %vm1460, %v1458, %v1194
      %v1492 = vsel %vm1460, %v1459, %v1196
      %v1493 = vld [vmem:[%s1] sm:$0xff]
      %v1494 = vld [vmem:[%s1 + $0x8] sm:$0xff]
      %v1495 = vld [vmem:[%s1 + $0x10] sm:$0xff]
      %v1496 = vld [vmem:[%s1 + $0x18] sm:$0xff]
      %v1497 = vld [vmem:[%s1 + $0x20] sm:$0xf]
      %v1498 = vld [vmem:[%s2] sm:$0x1]
      %v1500 = vlaneseq
      %v1501 = vshrl.u32 %v1500, 7
      %v1502 = vsub.s32 0, %v1501
      %v1503 = vrot.slane %v1498, %v1502
      %vm1505 = vcmask 293888
      %v1507 = vsel %vm1505, %v1461, 0
      %v1510 = vsel %vm1505, %v1462, 0
      %v1513 = vsel %vm1505, %v1463, 0
      %v1516 = vsel %vm1505, %v1464, 0
      %v1519 = vsel %vm1505, %v1465, 0
      %v1522 = vsel %vm1505, %v1466, 0
      %v1525 = vsel %vm1505, %v1467, 0
      %v1528 = vsel %vm1505, %v1468, 0
      %v1531 = vsel %vm1505, %v1469, 0
      %v1534 = vsel %vm1505, %v1470, 0
      %v1537 = vsel %vm1505, %v1471, 0
      %v1540 = vsel %vm1505, %v1472, 0
      %v1543 = vsel %vm1505, %v1473, 0
      %v1546 = vsel %vm1505, %v1474, 0
      %v1549 = vsel %vm1505, %v1475, 0
      %v1552 = vsel %vm1505, %v1476, 0
      %v1555 = vsel %vm1505, %v1477, 0
      %v1558 = vsel %vm1505, %v1478, 0
      %v1561 = vsel %vm1505, %v1479, 0
      %v1564 = vsel %vm1505, %v1480, 0
      %v1567 = vsel %vm1505, %v1481, 0
      %v1570 = vsel %vm1505, %v1482, 0
      %v1573 = vsel %vm1505, %v1483, 0
      %v1576 = vsel %vm1505, %v1484, 0
      %v1579 = vsel %vm1505, %v1485, 0
      %v1582 = vsel %vm1505, %v1486, 0
      %v1585 = vsel %vm1505, %v1487, 0
      %v1588 = vsel %vm1505, %v1488, 0
      %v1591 = vsel %vm1505, %v1489, 0
      %v1594 = vsel %vm1505, %v1490, 0
      %v1597 = vsel %vm1505, %v1491, 0
      %v1600 = vsel %vm1505, %v1492, 0
      %vm1602 = vcmask 1043456
      %v1604 = vsel %vm1602, %v1497, 0
      %1606 = vmatprep.subr.mxu0 0.0
      %1607 = vmatpush1.msra.mxu0 %v1493
      %1608 = vmatprep.subr.mxu0 0.0
      %1609 = vmatpush1.msra.mxu0 %v1494
      %1610 = vmatprep.subr.mxu0 0.0
      %1611 = vmatpush1.msra.mxu0 %v1495
      %1612 = vmatprep.subr.mxu0 0.0
      %1613 = vmatpush1.msra.mxu0 %v1496
      %1614 = vmatprep.subr.mxu0 0.0
      %1615 = vmatpush1.msra.mxu0 %v1604
      %1616 = vmatprep.subr.mxu0 0.0
      %1617 = vmatpush1.msra.mxu0 0.0
      %1618 = vmatprep.subr.mxu0 0.0
      %1619 = vmatpush1.msra.mxu0 0.0
      %1620 = vmatprep.subr.mxu0 0.0
      %1621 = vmatpush1.msra.mxu0 0.0
      %1622 = vmatprep.subr.mxu0 0.0
      %1623 = vmatpush1.msra.mxu0 0.0
      %1624 = vmatprep.subr.mxu0 0.0
      %1625 = vmatpush1.msra.mxu0 0.0
      %1626 = vmatprep.subr.mxu0 0.0
      %1627 = vmatpush1.msra.mxu0 0.0
      %1628 = vmatprep.subr.mxu0 0.0
      %1629 = vmatpush1.msra.mxu0 0.0
      %1630 = vmatprep.subr.mxu0 0.0
      %1631 = vmatpush1.msra.mxu0 0.0
      %1632 = vmatprep.subr.mxu0 0.0
      %1633 = vmatpush1.msra.mxu0 0.0
      %1634 = vmatprep.subr.mxu0 0.0
      %1635 = vmatpush1.msra.mxu0 0.0
      %1636 = vmatprep.subr.mxu0 0.0
      %1637 = vmatpush1.msra.mxu0 0.0
      %1638 = vmatprep.subr.mxu0 0.0
      %1639 = vmatpush1.msra.mxu0 0.0
      %1640 = vmatprep.subr.mxu0 0.0
      %1641 = vmatpush1.msra.mxu0 0.0
      %1642 = vmatprep.subr.mxu0 0.0
      %1643 = vmatpush1.msra.mxu0 0.0
      %1644 = vmatprep.subr.mxu0 0.0
      %1645 = vmatpush1.msra.mxu0 0.0
      %1646 = vmatprep.subr.mxu0 0.0
      %1647 = vmatpush1.msra.mxu0 0.0
      %1648 = vmatprep.subr.mxu0 0.0
      %1649 = vmatpush1.msra.mxu0 0.0
      %1650 = vmatprep.subr.mxu0 0.0
      %1651 = vmatpush1.msra.mxu0 0.0
      %1652 = vmatprep.subr.mxu0 0.0
      %1653 = vmatpush1.msra.mxu0 0.0
      %1654 = vmatprep.subr.mxu0 0.0
      %1655 = vmatpush1.msra.mxu0 0.0
      %1656 = vmatprep.subr.mxu0 0.0
      %1657 = vmatpush1.msra.mxu0 0.0
      %1658 = vmatprep.subr.mxu0 0.0
      %1659 = vmatpush1.msra.mxu0 0.0
      %1660 = vmatprep.subr.mxu0 0.0
      %1661 = vmatpush1.msra.mxu0 0.0
      %1662 = vmatprep.subr.mxu0 0.0
      %1663 = vmatpush1.msra.mxu0 0.0
      %1664 = vmatprep.subr.mxu0 0.0
      %1665 = vmatpush1.msra.mxu0 0.0
      %1666 = vmatprep.subr.mxu0 0.0
      %1667 = vmatpush1.msra.mxu0 0.0
      %1668 = vmatprep.subr.mxu0 0.0
      %1669 = vmatpush1.msra.mxu0 0.0
      %1670 = vmatprep.mubr.f32.mxu0 0.0
      %1671 = vmatmul.mubr.f32.gmra.mrb[0].mxu0 %v1507
      %v1672 = vpop.f32.mrb[0].mxu0
      %v1673 = vadd.f32 %v1503, %v1672
      %v1674 = vpop.f32.mrb[0].mxu0
      %1675 = vmatprep.mubr.f32.mxu0 0.0
      %1676 = vmatmul.mubr.f32.gmra.mrb[0].mxu0 %v1510
      %v1677 = vpop.f32.mrb[0].mxu0
      %v1678 = vadd.f32 %v1503, %v1677
      %v1679 = vpop.f32.mrb[0].mxu0
      %1680 = vmatprep.mubr.f32.mxu0 0.0
      %1681 = vmatmul.mubr.f32.gmra.mrb[0].mxu0 %v1513
      %v1682 = vpop.f32.mrb[0].mxu0
      %v1683 = vadd.f32 %v1503, %v1682
      %v1684 = vpop.f32.mrb[0].mxu0
      %1685 = vmatprep.mubr.f32.mxu0 0.0
      %1686 = vmatmul.mubr.f32.gmra.mrb[0].mxu0 %v1516
      %v1687 = vpop.f32.mrb[0].mxu0
      %v1688 = vadd.f32 %v1503, %v1687
      %v1689 = vpop.f32.mrb[0].mxu0
      %1690 = vmatprep.mubr.f32.mxu0 0.0
      %1691 = vmatmul.mubr.f32.gmra.mrb[0].mxu0 %v1519
      %v1692 = vpop.f32.mrb[0].mxu0
      %v1693 = vadd.f32 %v1503, %v1692
      %v1694 = vpop.f32.mrb[0].mxu0
      %1695 = vmatprep.mubr.f32.mxu0 0.0
      %1696 = vmatmul.mubr.f32.gmra.mrb[0].mxu0 %v1522
      %v1697 = vpop.f32.mrb[0].mxu0
      %v1698 = vadd.f32 %v1503, %v1697
      %v1699 = vpop.f32.mrb[0].mxu0
      %1700 = vmatprep.mubr.f32.mxu0 0.0
      %1701 = vmatmul.mubr.f32.gmra.mrb[0].mxu0 %v1525
      %v1702 = vpop.f32.mrb[0].mxu0
      %v1703 = vadd.f32 %v1503, %v1702
      %v1704 = vpop.f32.mrb[0].mxu0
      %1705 = vmatprep.mubr.f32.mxu0 0.0
      %1706 = vmatmul.mubr.f32.gmra.mrb[0].mxu0 %v1528
      %v1707 = vpop.f32.mrb[0].mxu0
      %v1708 = vadd.f32 %v1503, %v1707
      %v1709 = vpop.f32.mrb[0].mxu0
      %1710 = vmatprep.mubr.f32.mxu0 0.0
      %1711 = vmatmul.mubr.f32.gmra.mrb[0].mxu0 %v1531
      %v1712 = vpop.f32.mrb[0].mxu0
      %v1713 = vadd.f32 %v1503, %v1712
      %v1714 = vpop.f32.mrb[0].mxu0
      %1715 = vmatprep.mubr.f32.mxu0 0.0
      %1716 = vmatmul.mubr.f32.gmra.mrb[0].mxu0 %v1534
      %v1717 = vpop.f32.mrb[0].mxu0
      %v1718 = vadd.f32 %v1503, %v1717
      %v1719 = vpop.f32.mrb[0].mxu0
      %1720 = vmatprep.mubr.f32.mxu0 0.0
      %1721 = vmatmul.mubr.f32.gmra.mrb[0].mxu0 %v1537
      %v1722 = vpop.f32.mrb[0].mxu0
      %v1723 = vadd.f32 %v1503, %v1722
      %v1724 = vpop.f32.mrb[0].mxu0
      %1725 = vmatprep.mubr.f32.mxu0 0.0
      %1726 = vmatmul.mubr.f32.gmra.mrb[0].mxu0 %v1540
      %v1727 = vpop.f32.mrb[0].mxu0
      %v1728 = vadd.f32 %v1503, %v1727
      %v1729 = vpop.f32.mrb[0].mxu0
      %1730 = vmatprep.mubr.f32.mxu0 0.0
      %1731 = vmatmul.mubr.f32.gmra.mrb[0].mxu0 %v1543
      %v1732 = vpop.f32.mrb[0].mxu0
      %v1733 = vadd.f32 %v1503, %v1732
      %v1734 = vpop.f32.mrb[0].mxu0
      %1735 = vmatprep.mubr.f32.mxu0 0.0
      %1736 = vmatmul.mubr.f32.gmra.mrb[0].mxu0 %v1546
      %v1737 = vpop.f32.mrb[0].mxu0
      %v1738 = vadd.f32 %v1503, %v1737
      %v1739 = vpop.f32.mrb[0].mxu0
      %1740 = vmatprep.mubr.f32.mxu0 0.0
      %1741 = vmatmul.mubr.f32.gmra.mrb[0].mxu0 %v1549
      %v1742 = vpop.f32.mrb[0].mxu0
      %v1743 = vadd.f32 %v1503, %v1742
      %v1744 = vpop.f32.mrb[0].mxu0
      %1745 = vmatprep.mubr.f32.mxu0 0.0
      %1746 = vmatmul.mubr.f32.gmra.mrb[0].mxu0 %v1552
      %v1747 = vpop.f32.mrb[0].mxu0
      %v1748 = vadd.f32 %v1503, %v1747
      %v1749 = vpop.f32.mrb[0].mxu0
      %1750 = vmatprep.mubr.f32.mxu0 0.0
      %1751 = vmatmul.mubr.f32.gmra.mrb[0].mxu0 %v1555
      %v1752 = vpop.f32.mrb[0].mxu0
      %v1753 = vadd.f32 %v1503, %v1752
      %v1754 = vpop.f32.mrb[0].mxu0
      %1755 = vmatprep.mubr.f32.mxu0 0.0
      %1756 = vmatmul.mubr.f32.gmra.mrb[0].mxu0 %v1558
      %v1757 = vpop.f32.mrb[0].mxu0
      %v1758 = vadd.f32 %v1503, %v1757
      %v1759 = vpop.f32.mrb[0].mxu0
      %1760 = vmatprep.mubr.f32.mxu0 0.0
      %1761 = vmatmul.mubr.f32.gmra.mrb[0].mxu0 %v1561
      %v1762 = vpop.f32.mrb[0].mxu0
      %v1763 = vadd.f32 %v1503, %v1762
      %v1764 = vpop.f32.mrb[0].mxu0
      %1765 = vmatprep.mubr.f32.mxu0 0.0
      %1766 = vmatmul.mubr.f32.gmra.mrb[0].mxu0 %v1564
      %v1767 = vpop.f32.mrb[0].mxu0
      %v1768 = vadd.f32 %v1503, %v1767
      %v1769 = vpop.f32.mrb[0].mxu0
      %1770 = vmatprep.mubr.f32.mxu0 0.0
      %1771 = vmatmul.mubr.f32.gmra.mrb[0].mxu0 %v1567
      %v1772 = vpop.f32.mrb[0].mxu0
      %v1773 = vadd.f32 %v1503, %v1772
      %v1774 = vpop.f32.mrb[0].mxu0
      %1775 = vmatprep.mubr.f32.mxu0 0.0
      %1776 = vmatmul.mubr.f32.gmra.mrb[0].mxu0 %v1570
      %v1777 = vpop.f32.mrb[0].mxu0
      %v1778 = vadd.f32 %v1503, %v1777
      %v1779 = vpop.f32.mrb[0].mxu0
      %1780 = vmatprep.mubr.f32.mxu0 0.0
      %1781 = vmatmul.mubr.f32.gmra.mrb[0].mxu0 %v1573
      %v1782 = vpop.f32.mrb[0].mxu0
      %v1783 = vadd.f32 %v1503, %v1782
      %v1784 = vpop.f32.mrb[0].mxu0
      %1785 = vmatprep.mubr.f32.mxu0 0.0
      %1786 = vmatmul.mubr.f32.gmra.mrb[0].mxu0 %v1576
      %v1787 = vpop.f32.mrb[0].mxu0
      %v1788 = vadd.f32 %v1503, %v1787
      %v1789 = vpop.f32.mrb[0].mxu0
      %1790 = vmatprep.mubr.f32.mxu0 0.0
      %1791 = vmatmul.mubr.f32.gmra.mrb[0].mxu0 %v1579
      %v1792 = vpop.f32.mrb[0].mxu0
      %v1793 = vadd.f32 %v1503, %v1792
      %v1794 = vpop.f32.mrb[0].mxu0
      %1795 = vmatprep.mubr.f32.mxu0 0.0
      %1796 = vmatmul.mubr.f32.gmra.mrb[0].mxu0 %v1582
      %v1797 = vpop.f32.mrb[0].mxu0
      %v1798 = vadd.f32 %v1503, %v1797
      %v1799 = vpop.f32.mrb[0].mxu0
      %1800 = vmatprep.mubr.f32.mxu0 0.0
      %1801 = vmatmul.mubr.f32.gmra.mrb[0].mxu0 %v1585
      %v1802 = vpop.f32.mrb[0].mxu0
      %v1803 = vadd.f32 %v1503, %v1802
      %v1804 = vpop.f32.mrb[0].mxu0
      %1805 = vmatprep.mubr.f32.mxu0 0.0
      %1806 = vmatmul.mubr.f32.gmra.mrb[0].mxu0 %v1588
      %v1807 = vpop.f32.mrb[0].mxu0
      %v1808 = vadd.f32 %v1503, %v1807
      %v1809 = vpop.f32.mrb[0].mxu0
      %1810 = vmatprep.mubr.f32.mxu0 0.0
      %1811 = vmatmul.mubr.f32.gmra.mrb[0].mxu0 %v1591
      %v1812 = vpop.f32.mrb[0].mxu0
      %v1813 = vadd.f32 %v1503, %v1812
      %v1814 = vpop.f32.mrb[0].mxu0
      %1815 = vmatprep.mubr.f32.mxu0 0.0
      %1816 = vmatmul.mubr.f32.gmra.mrb[0].mxu0 %v1594
      %v1817 = vpop.f32.mrb[0].mxu0
      %v1818 = vadd.f32 %v1503, %v1817
      %v1819 = vpop.f32.mrb[0].mxu0
      %1820 = vmatprep.mubr.f32.mxu0 0.0
      %1821 = vmatmul.mubr.f32.gmra.mrb[0].mxu0 %v1597
      %v1822 = vpop.f32.mrb[0].mxu0
      %v1823 = vadd.f32 %v1503, %v1822
      %v1824 = vpop.f32.mrb[0].mxu0
      %1825 = vmatprep.mubr.f32.mxu0 0.0
      %1826 = vmatmul.mubr.f32.gmra.mrb[0].mxu0 %v1600
      %v1827 = vpop.f32.mrb[0].mxu0
      %v1828 = vadd.f32 %v1503, %v1827
      %v1829 = vpop.f32.mrb[0].mxu0
      %1830 = vdwg.mxu0
      %1831 = vst.msk [vmem:[%s170] sm:$0xff] %vm1229, %v1673
      %1832 = vst.msk [vmem:[%s170 + $0x8] sm:$0xff] %vm1229, %v1678
      %1833 = vst.msk [vmem:[%s170 + $0x10] sm:$0xff] %vm1229, %v1683
      %1834 = vst.msk [vmem:[%s170 + $0x18] sm:$0xff] %vm1229, %v1688
      %1835 = vst.msk [vmem:[%s170 + $0x20] sm:$0xff] %vm1229, %v1693
      %1836 = vst.msk [vmem:[%s170 + $0x28] sm:$0xff] %vm1229, %v1698
      %1837 = vst.msk [vmem:[%s170 + $0x30] sm:$0xff] %vm1229, %v1703
      %1838 = vst.msk [vmem:[%s170 + $0x38] sm:$0xff] %vm1229, %v1708
      %1839 = vst.msk [vmem:[%s170 + $0x40] sm:$0xff] %vm1229, %v1713
      %1840 = vst.msk [vmem:[%s170 + $0x48] sm:$0xff] %vm1229, %v1718
      %1841 = vst.msk [vmem:[%s170 + $0x50] sm:$0xff] %vm1229, %v1723
      %1842 = vst.msk [vmem:[%s170 + $0x58] sm:$0xff] %vm1229, %v1728
      %1843 = vst.msk [vmem:[%s170 + $0x60] sm:$0xff] %vm1229, %v1733
      %1844 = vst.msk [vmem:[%s170 + $0x68] sm:$0xff] %vm1229, %v1738
      %1845 = vst.msk [vmem:[%s170 + $0x70] sm:$0xff] %vm1229, %v1743
      %1846 = vst.msk [vmem:[%s170 + $0x78] sm:$0xff] %vm1229, %v1748
      %1847 = vst.msk [vmem:[%s170 + $0x80] sm:$0xff] %vm1229, %v1753
      %1848 = vst.msk [vmem:[%s170 + $0x88] sm:$0xff] %vm1229, %v1758
      %1849 = vst.msk [vmem:[%s170 + $0x90] sm:$0xff] %vm1229, %v1763
      %1850 = vst.msk [vmem:[%s170 + $0x98] sm:$0xff] %vm1229, %v1768
      %1851 = vst.msk [vmem:[%s170 + $0xa0] sm:$0xff] %vm1229, %v1773
      %1852 = vst.msk [vmem:[%s170 + $0xa8] sm:$0xff] %vm1229, %v1778
      %1853 = vst.msk [vmem:[%s170 + $0xb0] sm:$0xff] %vm1229, %v1783
      %1854 = vst.msk [vmem:[%s170 + $0xb8] sm:$0xff] %vm1229, %v1788
      %1855 = vst.msk [vmem:[%s170 + $0xc0] sm:$0xff] %vm1229, %v1793
      %1856 = vst.msk [vmem:[%s170 + $0xc8] sm:$0xff] %vm1229, %v1798
      %1857 = vst.msk [vmem:[%s170 + $0xd0] sm:$0xff] %vm1229, %v1803
      %1858 = vst.msk [vmem:[%s170 + $0xd8] sm:$0xff] %vm1229, %v1808
      %1859 = vst.msk [vmem:[%s170 + $0xe0] sm:$0xff] %vm1229, %v1813
      %1860 = vst.msk [vmem:[%s170 + $0xe8] sm:$0xff] %vm1229, %v1818
      %1861 = vst.msk [vmem:[%s170 + $0xf0] sm:$0xff] %vm1229, %v1823
      %1862 = vst.msk [vmem:[%s170 + $0xf8] sm:$0xff] %vm1229, %v1828
      %p1863 = scmp.lt.s32.totalorder %s14, 1
      %s1864 = scalar_select %p1863, %s14, 1
      %s1865 = smul.addr %s1864, 32
      %s1866 = smul.addr %s1865, 8
      %s1867 = scalar_lea.vmem %s3, %s1866
      // Predicated region
      $region33: #{tpu_custom_call.1} parent=31 // pred_check
        %p1868 = pneg %p100
      $region34: #{tpu_custom_call.1} parent=31 // pred_check_branch
        %1870 = sbr.rel (%p1868) target = $region36
      $region35: #{tpu_custom_call.1} parent=31 // pred_region
        _
      $region36: #{tpu_custom_call.1} parent=31 // pred_fallthru
        _
    $region32: #{tpu_custom_call.1} parent=5 // pred_fallthru
      _
    %p1871 = scmp.le.s32.totalorder 2, %s9
    // Predicated region
    $region37: #{tpu_custom_call.1} parent=5 // pred_check
      %p1872 = pneg %p1871
    $region38: #{tpu_custom_call.1} parent=5 // pred_check_branch
      %1874 = sbr.rel (%p1872) target = $region40
    $region39: #{tpu_custom_call.1} parent=5 // pred_region
      %s1875 = ssub.s32 %s9, 2
      // Predicated region
      $region41: #{tpu_custom_call.1} parent=39 // pred_check
        %p1876 = pneg %p106
      $region42: #{tpu_custom_call.1} parent=39 // pred_check_branch
        %1878 = sbr.rel (%p1876) target = $region44
      $region43: #{tpu_custom_call.1} parent=39 // pred_region
        %p1879 = scmp.lt.s32.totalorder %s15, 1
        %s1880 = scalar_select %p1879, %s15, 1
        %s1881 = smul.addr %s1880, 32
        %s1882 = smul.addr %s1881, 8
        %s1883 = scalar_lea.vmem %s3, %s1882
      $region44: #{tpu_custom_call.1} parent=39 // pred_fallthru
        _
    $region40: #{tpu_custom_call.1} parent=5 // pred_fallthru
      _
  $region6: #{tpu_custom_call.1} parent=0 // loop_footer
    %s13 = sadd.s32 1, %s9
  $region7: #{tpu_custom_call.1} parent=0 // loop_footer_branch
    %8 = sbr.rel target = $region3
  $region8: #{tpu_custom_call.1} parent=0 // loop_exit
    _

</llo_original>
